<compile_context>
chip_gen: v6e
topology: v6e:2x2x1
jax: 0.10.0
libtpu: 0.0.40
codegen_flags: <defaults>
</compile_context>

<pallas_src>
import functools

import jax
import jax.numpy as jnp
from jax import lax
from jax.experimental import pallas as pl
from jax.experimental.pallas import tpu as pltpu

STATE_DIM = 4      # CartPole-v1 observation dim
HIDDEN_DIM = 128


def _round_up(x, m):
    return ((x + m - 1) // m) * m


def _value_critic_kernel(xt_ref, w1t_ref, b1t_ref, w2_ref, b2_ref, o_ref):
    # xt : (STATE_DIM, TB)     batch on lanes
    # w1t: (HIDDEN_DIM, STATE_DIM)
    # b1t: (HIDDEN_DIM, 1)
    # w2 : (1, HIDDEN_DIM)
    # b2 : (1, 1) scalar in SMEM
    xt = xt_ref[...]

    # ---- Layer 1 on the MXU: h = relu(W1^T @ x^T + b1^T), shape (H, TB). ----
    h = jnp.dot(w1t_ref[...], xt,
                preferred_element_type=jnp.float32,
                precision=lax.Precision.HIGHEST)
    h = jnp.maximum(h + b1t_ref[...], 0.0)                 # bias + ReLU (VPU)

    # ---- Layer 2 on the MXU: v^T = W2 @ h + b2, shape (1, TB) lane-dense. ----
    v = jnp.dot(w2_ref[...], h,
                preferred_element_type=jnp.float32,
                precision=lax.Precision.HIGHEST)
    o_ref[...] = (v + b2_ref[0, 0]).astype(o_ref.dtype)


@functools.partial(jax.jit, static_argnames=("block_b",))
def value_critic_forward(x, w1, b1, w2, b2, *, block_b=4096):
    """x: (B, STATE_DIM) f32 -> (B, 1) f32.

    Params use the same math as the PyTorch module:
      w1: (STATE_DIM, HIDDEN_DIM)  (= torch layer-1 weight, transposed)
      b1: (1, HIDDEN_DIM)
      w2: (1, HIDDEN_DIM)          (= torch layer-2 weight)
      b2: (1, 1)
    """
    B = x.shape[0]
    assert x.shape[1] == STATE_DIM
    assert block_b % 128 == 0, "block_b must be a multiple of 128 (lane width)"

    # Layout plumbing (tiny copies): batch onto lanes, hidden onto sublanes.
    xt = jnp.transpose(x).astype(jnp.float32)          # (STATE_DIM, B)
    w1t = jnp.transpose(w1)                             # (HIDDEN_DIM, STATE_DIM)
    b1t = b1.reshape(HIDDEN_DIM, 1)                     # (HIDDEN_DIM, 1)

    # Tile size: big enough to amortize ~0.35us/step, small enough that large
    # batches still give >= 2 grid steps (v7x has 2 TensorCores).
    tb = min(block_b, _round_up(B, 128))
    n_tiles = pl.cdiv(B, tb)
    if n_tiles == 1 and B > 256:
        tb = _round_up(pl.cdiv(B, 2), 128)
        n_tiles = pl.cdiv(B, tb)

    cost = pl.CostEstimate(
        flops=2 * B * (STATE_DIM * HIDDEN_DIM + HIDDEN_DIM),
        transcendentals=0,
        bytes_accessed=B * (STATE_DIM + 1) * 4 + (STATE_DIM + 2) * HIDDEN_DIM * 4,
    )

    out = pl.pallas_call(
        _value_critic_kernel,
        out_shape=jax.ShapeDtypeStruct((1, B), jnp.float32),
        grid=(n_tiles,),
        in_specs=[
            pl.BlockSpec((STATE_DIM, tb), lambda i: (0, i)),          # x^T: streamed
            pl.BlockSpec((HIDDEN_DIM, STATE_DIM), lambda i: (0, 0)),  # W1^T: resident
            pl.BlockSpec((HIDDEN_DIM, 1), lambda i: (0, 0)),          # b1^T: resident
            pl.BlockSpec((1, HIDDEN_DIM), lambda i: (0, 0)),          # W2: resident
            pl.BlockSpec(memory_space=pltpu.MemorySpace.SMEM),        # b2: SMEM scalar
        ],
        out_specs=pl.BlockSpec((1, tb), lambda i: (0, i)),            # lane-dense out
        compiler_params=pltpu.CompilerParams(
            dimension_semantics=("parallel",),
        ),
        cost_estimate=cost,
    )(xt, w1t, b1t, w2, b2)

    return out.reshape(B, 1)                             # (1, B) -> (B, 1)


def init_params(key):
    """Deterministic init matching PyTorch nn.Linear default:
    U(-1/sqrt(fan_in), 1/sqrt(fan_in)) for both weight and bias."""
    k1, k2, k3, k4 = jax.random.split(key, 4)
    bound1 = 1.0 / jnp.sqrt(jnp.float32(STATE_DIM))
    bound2 = 1.0 / jnp.sqrt(jnp.float32(HIDDEN_DIM))
    w1 = jax.random.uniform(k1, (STATE_DIM, HIDDEN_DIM), jnp.float32, -bound1, bound1)
    b1 = jax.random.uniform(k2, (1, HIDDEN_DIM), jnp.float32, -bound1, bound1)
    w2 = jax.random.uniform(k3, (1, HIDDEN_DIM), jnp.float32, -bound2, bound2)
    b2 = jax.random.uniform(k4, (1, 1), jnp.float32, -bound2, bound2)
    return w1, b1, w2, b2


if __name__ == "__main__":
    key = jax.random.PRNGKey(0)
    pkey, xkey = jax.random.split(key)
    w1, b1, w2, b2 = init_params(pkey)

    def ref_fn(xs):
        h = jnp.maximum(
            jnp.matmul(xs, w1, precision=lax.Precision.HIGHEST) + b1, 0.0)
        return jnp.matmul(h, w2.T, precision=lax.Precision.HIGHEST) + b2

    # Small batch (single partial tile, B < 128).
    x_small = jax.random.normal(xkey, (8, STATE_DIM), jnp.float32)
    out_small = jax.block_until_ready(value_critic_forward(x_small, w1, b1, w2, b2))
    assert out_small.shape == (8, 1)
    assert jnp.allclose(out_small, ref_fn(x_small), atol=1e-4, rtol=1e-4)

    # Batch that is not a multiple of the tile: multiple pipelined grid steps
    # plus a masked partial tail block (no jnp.pad in the wrapper).
    x_big = jax.random.normal(jax.random.PRNGKey(1), (300, STATE_DIM), jnp.float32)
    out_big = jax.block_until_ready(
        value_critic_forward(x_big, w1, b1, w2, b2, block_b=128))
    assert out_big.shape == (300, 1)
    assert jnp.allclose(out_big, ref_fn(x_big), atol=1e-4, rtol=1e-4)

    print("KERNEL_OK")
</pallas_src>

<mosaic_0001>
module attributes {stable_mosaic.version = 11 : i64} {
  func.func @_value_critic_kernel(%arg0: i32, %arg1: memref<4x128xf32, #tpu.memory_space<vmem>>, %arg2: memref<128x4xf32, #tpu.memory_space<vmem>>, %arg3: memref<128x1xf32, #tpu.memory_space<vmem>>, %arg4: memref<1x128xf32, #tpu.memory_space<vmem>>, %arg5: memref<1x1xf32, #tpu.memory_space<smem>>, %arg6: memref<1x128xf32, #tpu.memory_space<vmem>>) attributes {dimension_semantics = [#tpu.dimension_semantics<parallel>], iteration_bounds = array<i64: 1>, scalar_prefetch = 0 : i64, scratch_operands = 0 : i64, tpu.core_type = #tpu.core_type<tc>, window_params = [{transform_indices = @transform_0, window_bounds = array<i64: 4, 128>}, {pipeline_mode = #tpu.pipeline_mode<synchronous>, transform_indices = @transform_1, window_bounds = array<i64: 128, 4>}, {pipeline_mode = #tpu.pipeline_mode<synchronous>, transform_indices = @transform_2, window_bounds = array<i64: 128, 1>}, {pipeline_mode = #tpu.pipeline_mode<synchronous>, transform_indices = @transform_3, window_bounds = array<i64: 1, 128>}, {transform_indices = @transform_4, window_bounds = array<i64: 1, 1>}, {transform_indices = @transform_5, window_bounds = array<i64: 1, 128>}]} {
    %c0 = arith.constant 0 : index
    %c0_0 = arith.constant 0 : index
    %0 = vector.load %arg1[%c0, %c0_0] : memref<4x128xf32, #tpu.memory_space<vmem>>, vector<4x128xf32>
    %c0_1 = arith.constant 0 : index
    %c0_2 = arith.constant 0 : index
    %1 = vector.load %arg2[%c0_1, %c0_2] : memref<128x4xf32, #tpu.memory_space<vmem>>, vector<128x4xf32>
    %cst = arith.constant dense<0.000000e+00> : vector<128x128xf32>
    %2 = tpu.matmul %1, %0, %cst {dimension_numbers = #tpu.dot_dimension_numbers<[1], [0], [0], [1], [0, 0, 1, 1], [], []>, precision = #tpu.contract_precision<fp32>} : vector<128x4xf32>, vector<4x128xf32>, vector<128x128xf32> -> vector<128x128xf32>
    %c0_3 = arith.constant 0 : index
    %c0_4 = arith.constant 0 : index
    %3 = vector.load %arg3[%c0_3, %c0_4] : memref<128x1xf32, #tpu.memory_space<vmem>>, vector<128x1xf32>
    %4 = vector.broadcast %3 : vector<128x1xf32> to vector<128x128xf32>
    %5 = arith.addf %2, %4 : vector<128x128xf32>
    %cst_5 = arith.constant 0.000000e+00 : f32
    %6 = vector.broadcast %cst_5 : f32 to vector<128x128xf32>
    %7 = arith.maximumf %5, %6 : vector<128x128xf32>
    %c0_6 = arith.constant 0 : index
    %c0_7 = arith.constant 0 : index
    %8 = vector.load %arg4[%c0_6, %c0_7] : memref<1x128xf32, #tpu.memory_space<vmem>>, vector<1x128xf32>
    %cst_8 = arith.constant dense<0.000000e+00> : vector<1x128xf32>
    %9 = tpu.matmul %8, %7, %cst_8 {dimension_numbers = #tpu.dot_dimension_numbers<[1], [0], [0], [1], [0, 0, 1, 1], [], []>, precision = #tpu.contract_precision<fp32>} : vector<1x128xf32>, vector<128x128xf32>, vector<1x128xf32> -> vector<1x128xf32>
    %c0_9 = arith.constant 0 : index
    %c0_10 = arith.constant 0 : index
    %10 = memref.load %arg5[%c0_9, %c0_10] : memref<1x1xf32, #tpu.memory_space<smem>>
    %11 = vector.broadcast %10 : f32 to vector<1x128xf32>
    %12 = arith.addf %9, %11 : vector<1x128xf32>
    %c0_11 = arith.constant 0 : index
    %c0_12 = arith.constant 0 : index
    %13 = vector.load %arg6[%c0_11, %c0_12] : memref<1x128xf32, #tpu.memory_space<vmem>>, vector<1x128xf32>
    tpu.vector_store %arg6[%c0_11, %c0_12], %12 {strides = array<i32>} : memref<1x128xf32, #tpu.memory_space<vmem>>, vector<1x128xf32>,
    return
  }
  func.func @transform_0(%arg0: i32) -> (i32, i32) {
    %c0_i32 = arith.constant 0 : i32
    %c0_i32_0 = arith.constant 0 : i32
    return %c0_i32, %arg0 : i32, i32
  }
  func.func @transform_1(%arg0: i32) -> (i32, i32) {
    %c0_i32 = arith.constant 0 : i32
    %c0_i32_0 = arith.constant 0 : i32
    %c0_i32_1 = arith.constant 0 : i32
    return %c0_i32, %c0_i32_0 : i32, i32
  }
  func.func @transform_2(%arg0: i32) -> (i32, i32) {
    %c0_i32 = arith.constant 0 : i32
    %c0_i32_0 = arith.constant 0 : i32
    %c0_i32_1 = arith.constant 0 : i32
    return %c0_i32, %c0_i32_0 : i32, i32
  }
  func.func @transform_3(%arg0: i32) -> (i32, i32) {
    %c0_i32 = arith.constant 0 : i32
    %c0_i32_0 = arith.constant 0 : i32
    %c0_i32_1 = arith.constant 0 : i32
    return %c0_i32, %c0_i32_0 : i32, i32
  }
  func.func @transform_4(%arg0: i32) -> (i32, i32) {
    %c0_i32 = arith.constant 0 : i32
    %c0_i32_0 = arith.constant 0 : i32
    %c0_i32_1 = arith.constant 0 : i32
    return %c0_i32, %c0_i32_0 : i32, i32
  }
  func.func @transform_5(%arg0: i32) -> (i32, i32) {
    %c0_i32 = arith.constant 0 : i32
    %c0_i32_0 = arith.constant 0 : i32
    return %c0_i32, %arg0 : i32, i32
  }
}

</mosaic_0001>

<llo_original>
// kernel: value_critic_forward.1
$region0: #{value_critic_forward.1}
  #allocation0 [shape = 'u32[]', space=smem, size = 0x4, offset = 0x4, fixed_abs, tag = 'smem constant byte address 0x4 - core index']
  #allocation1 [shape = 'u32[144,128]{1,0:T(1,128)}', space=vmem, size = 0x12000, scoped, tag = 'internal scratch']
  #allocation2 [shape = 'f32[1,1]{1,0:T(1,128)S(6)}', space=smem, size = 0x200, scoped, tag = 'scoped memory for value_critic_forward.1']
  %s0 = inlined_call_operand.vmem [shape: f32[4,8], index: 0, kind: input, shape index: {}]
  %s1 = inlined_call_operand.vmem [shape: f32[128,4], index: 1, kind: input, shape index: {}]
  %s2 = inlined_call_operand.vmem [shape: f32[128,1], index: 2, kind: input, shape index: {}]
  %s3 = inlined_call_operand.vmem [shape: f32[1,128], index: 3, kind: input, shape index: {}]
  %s4 = inlined_call_operand.<no memory space> [shape: f32[1,1], index: 4, kind: input, shape index: {}]
  %s5 = inlined_call_operand.hbm [shape: f32[1,8], index: 5, kind: output, shape index: {}]
  %s6 = sld [smem:[#allocation0]]
  $region30: #{value_critic_forward.1} parent=0
    _
  %s8 = ssub.s32 1, %s6
  %s9 = scalar_select 0, %s8, %s6
  %10 = sst [smem:[#allocation2]] %s4
  $region1: #{value_critic_forward.1} parent=0
    #allocation3 [shape = 'u8[512]{0}', space=vmem, size = 0x400, scoped, tag = 'output window, operand 0, single buffered']
    #allocation4 [shape = 's32[1]{0}', space=sflag, size = 0x4, scoped, tag = 'scoped memory for value_critic_forward.1']
    %11 = vsyncpa [#allocation4], 0
    // Predicated region
    $region2: #{value_critic_forward.1} parent=1 // pred_check
      _
    $region3: #{value_critic_forward.1} parent=1 // pred_check_branch
      %13 = sbr.rel (0) target = $region5
    $region4: #{value_critic_forward.1} parent=1 // pred_region
      _
    $region5: #{value_critic_forward.1} parent=1 // pred_fallthru
      _
    // Predicated region
    $region6: #{value_critic_forward.1} parent=1 // pred_check
      _
    $region7: #{value_critic_forward.1} parent=1 // pred_check_branch
      %15 = sbr.rel (0) target = $region9
    $region8: #{value_critic_forward.1} parent=1 // pred_region
      _
    $region9: #{value_critic_forward.1} parent=1 // pred_fallthru
      _
    // Predicated region
    $region10: #{value_critic_forward.1} parent=1 // pred_check
      _
    $region11: #{value_critic_forward.1} parent=1 // pred_check_branch
      %17 = sbr.rel (0) target = $region13
    $region12: #{value_critic_forward.1} parent=1 // pred_region
      _
    $region13: #{value_critic_forward.1} parent=1 // pred_fallthru
      _
    // Predicated region
    $region14: #{value_critic_forward.1} parent=1 // pred_check
      _
    $region15: #{value_critic_forward.1} parent=1 // pred_check_branch
      %19 = sbr.rel (0) target = $region17
    $region16: #{value_critic_forward.1} parent=1 // pred_region
      _
    $region17: #{value_critic_forward.1} parent=1 // pred_fallthru
      _
    // Predicated region
    $region18: #{value_critic_forward.1} parent=1 // pred_check
      _
    $region19: #{value_critic_forward.1} parent=1 // pred_check_branch
      %21 = sbr.rel (0) target = $region21
    $region20: #{value_critic_forward.1} parent=1 // pred_region
      _
    $region21: #{value_critic_forward.1} parent=1 // pred_fallthru
      _
    %v22 = vld [vmem:[%s0] sm:$0xf]
    %v23 = vld [vmem:[%s1] sm:$0xff]
    %v24 = vld [vmem:[%s1 + $0x8] sm:$0xff]
    %v25 = vld [vmem:[%s1 + $0x10] sm:$0xff]
    %v26 = vld [vmem:[%s1 + $0x18] sm:$0xff]
    %v27 = vld [vmem:[%s1 + $0x20] sm:$0xff]
    %v28 = vld [vmem:[%s1 + $0x28] sm:$0xff]
    %v29 = vld [vmem:[%s1 + $0x30] sm:$0xff]
    %v30 = vld [vmem:[%s1 + $0x38] sm:$0xff]
    %v31 = vld [vmem:[%s1 + $0x40] sm:$0xff]
    %v32 = vld [vmem:[%s1 + $0x48] sm:$0xff]
    %v33 = vld [vmem:[%s1 + $0x50] sm:$0xff]
    %v34 = vld [vmem:[%s1 + $0x58] sm:$0xff]
    %v35 = vld [vmem:[%s1 + $0x60] sm:$0xff]
    %v36 = vld [vmem:[%s1 + $0x68] sm:$0xff]
    %v37 = vld [vmem:[%s1 + $0x70] sm:$0xff]
    %v38 = vld [vmem:[%s1 + $0x78] sm:$0xff]
    %v39 = vld [vmem:[%s2] sm:$0xff]
    %v40 = vld [vmem:[%s2 + $0x8] sm:$0xff]
    %v41 = vld [vmem:[%s2 + $0x10] sm:$0xff]
    %v42 = vld [vmem:[%s2 + $0x18] sm:$0xff]
    %v43 = vld [vmem:[%s2 + $0x20] sm:$0xff]
    %v44 = vld [vmem:[%s2 + $0x28] sm:$0xff]
    %v45 = vld [vmem:[%s2 + $0x30] sm:$0xff]
    %v46 = vld [vmem:[%s2 + $0x38] sm:$0xff]
    %v47 = vld [vmem:[%s2 + $0x40] sm:$0xff]
    %v48 = vld [vmem:[%s2 + $0x48] sm:$0xff]
    %v49 = vld [vmem:[%s2 + $0x50] sm:$0xff]
    %v50 = vld [vmem:[%s2 + $0x58] sm:$0xff]
    %v51 = vld [vmem:[%s2 + $0x60] sm:$0xff]
    %v52 = vld [vmem:[%s2 + $0x68] sm:$0xff]
    %v53 = vld [vmem:[%s2 + $0x70] sm:$0xff]
    %v54 = vld [vmem:[%s2 + $0x78] sm:$0xff]
    %56 = vset.pattern.permute.xlu0 0
    %57 = vperm.xlu0 %56, %v39
    %v58 = vpop.permute.xlu0 %57
    %61 = vset.pattern.permute.xlu0 0
    %62 = vperm.xlu0 %61, %v40
    %v63 = vpop.permute.xlu0 %62
    %66 = vset.pattern.permute.xlu0 0
    %67 = vperm.xlu0 %66, %v41
    %v68 = vpop.permute.xlu0 %67
    %71 = vset.pattern.permute.xlu0 0
    %72 = vperm.xlu0 %71, %v42
    %v73 = vpop.permute.xlu0 %72
    %76 = vset.pattern.permute.xlu0 0
    %77 = vperm.xlu0 %76, %v43
    %v78 = vpop.permute.xlu0 %77
    %81 = vset.pattern.permute.xlu0 0
    %82 = vperm.xlu0 %81, %v44
    %v83 = vpop.permute.xlu0 %82
    %86 = vset.pattern.permute.xlu0 0
    %87 = vperm.xlu0 %86, %v45
    %v88 = vpop.permute.xlu0 %87
    %91 = vset.pattern.permute.xlu0 0
    %92 = vperm.xlu0 %91, %v46
    %v93 = vpop.permute.xlu0 %92
    %96 = vset.pattern.permute.xlu0 0
    %97 = vperm.xlu0 %96, %v47
    %v98 = vpop.permute.xlu0 %97
    %101 = vset.pattern.permute.xlu0 0
    %102 = vperm.xlu0 %101, %v48
    %v103 = vpop.permute.xlu0 %102
    %106 = vset.pattern.permute.xlu0 0
    %107 = vperm.xlu0 %106, %v49
    %v108 = vpop.permute.xlu0 %107
    %111 = vset.pattern.permute.xlu0 0
    %112 = vperm.xlu0 %111, %v50
    %v113 = vpop.permute.xlu0 %112
    %116 = vset.pattern.permute.xlu0 0
    %117 = vperm.xlu0 %116, %v51
    %v118 = vpop.permute.xlu0 %117
    %121 = vset.pattern.permute.xlu0 0
    %122 = vperm.xlu0 %121, %v52
    %v123 = vpop.permute.xlu0 %122
    %126 = vset.pattern.permute.xlu0 0
    %127 = vperm.xlu0 %126, %v53
    %v128 = vpop.permute.xlu0 %127
    %131 = vset.pattern.permute.xlu0 0
    %132 = vperm.xlu0 %131, %v54
    %v133 = vpop.permute.xlu0 %132
    %vm135 = vcmask 31744
    %v137 = vsel %vm135, %v23, 0
    %v140 = vsel %vm135, %v24, 0
    %v143 = vsel %vm135, %v25, 0
    %v146 = vsel %vm135, %v26, 0
    %v149 = vsel %vm135, %v27, 0
    %v152 = vsel %vm135, %v28, 0
    %v155 = vsel %vm135, %v29, 0
    %v158 = vsel %vm135, %v30, 0
    %v161 = vsel %vm135, %v31, 0
    %v164 = vsel %vm135, %v32, 0
    %v167 = vsel %vm135, %v33, 0
    %v170 = vsel %vm135, %v34, 0
    %v173 = vsel %vm135, %v35, 0
    %v176 = vsel %vm135, %v36, 0
    %v179 = vsel %vm135, %v37, 0
    %v182 = vsel %vm135, %v38, 0
    %vm184 = vcmask 1043456
    %v186 = vsel %vm184, %v22, 0
    %188 = vmatprep.subr.mxu0 0.0
    %189 = vmatpush1.msra.mxu0 0.0
    %190 = vmatprep.subr.mxu0 0.0
    %191 = vmatpush1.msra.mxu0 0.0
    %192 = vmatprep.subr.mxu0 0.0
    %193 = vmatpush1.msra.mxu0 0.0
    %194 = vmatprep.subr.mxu0 0.0
    %195 = vmatpush1.msra.mxu0 0.0
    %196 = vmatprep.subr.mxu0 0.0
    %197 = vmatpush1.msra.mxu0 0.0
    %198 = vmatprep.subr.mxu0 0.0
    %199 = vmatpush1.msra.mxu0 0.0
    %200 = vmatprep.subr.mxu0 0.0
    %201 = vmatpush1.msra.mxu0 0.0
    %202 = vmatprep.subr.mxu0 0.0
    %203 = vmatpush1.msra.mxu0 0.0
    %204 = vmatprep.subr.mxu0 0.0
    %205 = vmatpush1.msra.mxu0 0.0
    %206 = vmatprep.subr.mxu0 0.0
    %207 = vmatpush1.msra.mxu0 0.0
    %208 = vmatprep.subr.mxu0 0.0
    %209 = vmatpush1.msra.mxu0 0.0
    %210 = vmatprep.subr.mxu0 0.0
    %211 = vmatpush1.msra.mxu0 0.0
    %212 = vmatprep.subr.mxu0 0.0
    %213 = vmatpush1.msra.mxu0 0.0
    %214 = vmatprep.subr.mxu0 0.0
    %215 = vmatpush1.msra.mxu0 0.0
    %216 = vmatprep.subr.mxu0 0.0
    %217 = vmatpush1.msra.mxu0 0.0
    %218 = vmatprep.subr.mxu0 0.0
    %v219 = vand.u32 %v186, 4294901760
    %220 = vmatpush1.msra.mxu0 %v219
    %221 = vmatprep.subr.mxu0 0.0
    %222 = vmatpush2.msra.mxu0 0.0
    %223 = vmatprep.subr.mxu0 0.0
    %224 = vmatpush2.msra.mxu0 0.0
    %225 = vmatprep.subr.mxu0 0.0
    %226 = vmatpush2.msra.mxu0 0.0
    %227 = vmatprep.subr.mxu0 0.0
    %228 = vmatpush2.msra.mxu0 0.0
    %229 = vmatprep.subr.mxu0 0.0
    %230 = vmatpush2.msra.mxu0 0.0
    %231 = vmatprep.subr.mxu0 0.0
    %232 = vmatpush2.msra.mxu0 0.0
    %233 = vmatprep.subr.mxu0 0.0
    %234 = vmatpush2.msra.mxu0 0.0
    %235 = vmatprep.subr.mxu0 0.0
    %236 = vmatpush2.msra.mxu0 0.0
    %237 = vmatprep.subr.mxu0 0.0
    %238 = vmatpush2.msra.mxu0 0.0
    %239 = vmatprep.subr.mxu0 0.0
    %240 = vmatpush2.msra.mxu0 0.0
    %241 = vmatprep.subr.mxu0 0.0
    %242 = vmatpush2.msra.mxu0 0.0
    %243 = vmatprep.subr.mxu0 0.0
    %244 = vmatpush2.msra.mxu0 0.0
    %245 = vmatprep.subr.mxu0 0.0
    %246 = vmatpush2.msra.mxu0 0.0
    %247 = vmatprep.subr.mxu0 0.0
    %248 = vmatpush2.msra.mxu0 0.0
    %249 = vmatprep.subr.mxu0 0.0
    %250 = vmatpush2.msra.mxu0 0.0
    %251 = vmatprep.subr.mxu0 0.0
    %252 = vmatpush2.msra.mxu0 0.0
    %253 = vmatprep.mubr.f32.mxu0 0.0
    %v254 = vand.u32 %v137, 4294901760
    %v255 = vsub.f32 %v137, %v254
    %v256 = vand.u32 %v255, 4294901760
    %v257 = vsub.f32 %v255, %v256
    %v258 = vand.u32 %v257, 4294901760
    %259 = vmatmul.mubr.f32.gmra.mxu0 %v258
    %v260 = vpop.f32.mrf.mxu0
    %v261 = vadd.f32 %v58, %v260
    %v262 = vpop.f32.mrf.mxu0
    %263 = vmatprep.mubr.f32.mxu0 0.0
    %v264 = vand.u32 %v140, 4294901760
    %v265 = vsub.f32 %v140, %v264
    %v266 = vand.u32 %v265, 4294901760
    %v267 = vsub.f32 %v265, %v266
    %v268 = vand.u32 %v267, 4294901760
    %269 = vmatmul.mubr.f32.gmra.mxu0 %v268
    %v270 = vpop.f32.mrf.mxu0
    %v271 = vadd.f32 %v63, %v270
    %v272 = vpop.f32.mrf.mxu0
    %273 = vmatprep.mubr.f32.mxu0 0.0
    %v274 = vand.u32 %v143, 4294901760
    %v275 = vsub.f32 %v143, %v274
    %v276 = vand.u32 %v275, 4294901760
    %v277 = vsub.f32 %v275, %v276
    %v278 = vand.u32 %v277, 4294901760
    %279 = vmatmul.mubr.f32.gmra.mxu0 %v278
    %v280 = vpop.f32.mrf.mxu0
    %v281 = vadd.f32 %v68, %v280
    %v282 = vpop.f32.mrf.mxu0
    %283 = vmatprep.mubr.f32.mxu0 0.0
    %v284 = vand.u32 %v146, 4294901760
    %v285 = vsub.f32 %v146, %v284
    %v286 = vand.u32 %v285, 4294901760
    %v287 = vsub.f32 %v285, %v286
    %v288 = vand.u32 %v287, 4294901760
    %289 = vmatmul.mubr.f32.gmra.mxu0 %v288
    %v290 = vpop.f32.mrf.mxu0
    %v291 = vadd.f32 %v73, %v290
    %v292 = vpop.f32.mrf.mxu0
    %293 = vmatprep.mubr.f32.mxu0 0.0
    %v294 = vand.u32 %v149, 4294901760
    %v295 = vsub.f32 %v149, %v294
    %v296 = vand.u32 %v295, 4294901760
    %v297 = vsub.f32 %v295, %v296
    %v298 = vand.u32 %v297, 4294901760
    %299 = vmatmul.mubr.f32.gmra.mxu0 %v298
    %v300 = vpop.f32.mrf.mxu0
    %v301 = vadd.f32 %v78, %v300
    %v302 = vpop.f32.mrf.mxu0
    %303 = vmatprep.mubr.f32.mxu0 0.0
    %v304 = vand.u32 %v152, 4294901760
    %v305 = vsub.f32 %v152, %v304
    %v306 = vand.u32 %v305, 4294901760
    %v307 = vsub.f32 %v305, %v306
    %v308 = vand.u32 %v307, 4294901760
    %309 = vmatmul.mubr.f32.gmra.mxu0 %v308
    %v310 = vpop.f32.mrf.mxu0
    %v311 = vadd.f32 %v83, %v310
    %v312 = vpop.f32.mrf.mxu0
    %313 = vmatprep.mubr.f32.mxu0 0.0
    %v314 = vand.u32 %v155, 4294901760
    %v315 = vsub.f32 %v155, %v314
    %v316 = vand.u32 %v315, 4294901760
    %v317 = vsub.f32 %v315, %v316
    %v318 = vand.u32 %v317, 4294901760
    %319 = vmatmul.mubr.f32.gmra.mxu0 %v318
    %v320 = vpop.f32.mrf.mxu0
    %v321 = vadd.f32 %v88, %v320
    %v322 = vpop.f32.mrf.mxu0
    %323 = vmatprep.mubr.f32.mxu0 0.0
    %v324 = vand.u32 %v158, 4294901760
    %v325 = vsub.f32 %v158, %v324
    %v326 = vand.u32 %v325, 4294901760
    %v327 = vsub.f32 %v325, %v326
    %v328 = vand.u32 %v327, 4294901760
    %329 = vmatmul.mubr.f32.gmra.mxu0 %v328
    %v330 = vpop.f32.mrf.mxu0
    %v331 = vadd.f32 %v93, %v330
    %v332 = vpop.f32.mrf.mxu0
    %333 = vmatprep.mubr.f32.mxu0 0.0
    %v334 = vand.u32 %v161, 4294901760
    %v335 = vsub.f32 %v161, %v334
    %v336 = vand.u32 %v335, 4294901760
    %v337 = vsub.f32 %v335, %v336
    %v338 = vand.u32 %v337, 4294901760
    %339 = vmatmul.mubr.f32.gmra.mxu0 %v338
    %v340 = vpop.f32.mrf.mxu0
    %v341 = vadd.f32 %v98, %v340
    %v342 = vpop.f32.mrf.mxu0
    %343 = vmatprep.mubr.f32.mxu0 0.0
    %v344 = vand.u32 %v164, 4294901760
    %v345 = vsub.f32 %v164, %v344
    %v346 = vand.u32 %v345, 4294901760
    %v347 = vsub.f32 %v345, %v346
    %v348 = vand.u32 %v347, 4294901760
    %349 = vmatmul.mubr.f32.gmra.mxu0 %v348
    %v350 = vpop.f32.mrf.mxu0
    %v351 = vadd.f32 %v103, %v350
    %v352 = vpop.f32.mrf.mxu0
    %353 = vmatprep.mubr.f32.mxu0 0.0
    %v354 = vand.u32 %v167, 4294901760
    %v355 = vsub.f32 %v167, %v354
    %v356 = vand.u32 %v355, 4294901760
    %v357 = vsub.f32 %v355, %v356
    %v358 = vand.u32 %v357, 4294901760
    %359 = vmatmul.mubr.f32.gmra.mxu0 %v358
    %v360 = vpop.f32.mrf.mxu0
    %v361 = vadd.f32 %v108, %v360
    %v362 = vpop.f32.mrf.mxu0
    %363 = vmatprep.mubr.f32.mxu0 0.0
    %v364 = vand.u32 %v170, 4294901760
    %v365 = vsub.f32 %v170, %v364
    %v366 = vand.u32 %v365, 4294901760
    %v367 = vsub.f32 %v365, %v366
    %v368 = vand.u32 %v367, 4294901760
    %369 = vmatmul.mubr.f32.gmra.mxu0 %v368
    %v370 = vpop.f32.mrf.mxu0
    %v371 = vadd.f32 %v113, %v370
    %v372 = vpop.f32.mrf.mxu0
    %373 = vmatprep.mubr.f32.mxu0 0.0
    %v374 = vand.u32 %v173, 4294901760
    %v375 = vsub.f32 %v173, %v374
    %v376 = vand.u32 %v375, 4294901760
    %v377 = vsub.f32 %v375, %v376
    %v378 = vand.u32 %v377, 4294901760
    %379 = vmatmul.mubr.f32.gmra.mxu0 %v378
    %v380 = vpop.f32.mrf.mxu0
    %v381 = vadd.f32 %v118, %v380
    %v382 = vpop.f32.mrf.mxu0
    %383 = vmatprep.mubr.f32.mxu0 0.0
    %v384 = vand.u32 %v176, 4294901760
    %v385 = vsub.f32 %v176, %v384
    %v386 = vand.u32 %v385, 4294901760
    %v387 = vsub.f32 %v385, %v386
    %v388 = vand.u32 %v387, 4294901760
    %389 = vmatmul.mubr.f32.gmra.mxu0 %v388
    %v390 = vpop.f32.mrf.mxu0
    %v391 = vadd.f32 %v123, %v390
    %v392 = vpop.f32.mrf.mxu0
    %393 = vmatprep.mubr.f32.mxu0 0.0
    %v394 = vand.u32 %v179, 4294901760
    %v395 = vsub.f32 %v179, %v394
    %v396 = vand.u32 %v395, 4294901760
    %v397 = vsub.f32 %v395, %v396
    %v398 = vand.u32 %v397, 4294901760
    %399 = vmatmul.mubr.f32.gmra.mxu0 %v398
    %v400 = vpop.f32.mrf.mxu0
    %v401 = vadd.f32 %v128, %v400
    %v402 = vpop.f32.mrf.mxu0
    %403 = vmatprep.mubr.f32.mxu0 0.0
    %v404 = vand.u32 %v182, 4294901760
    %v405 = vsub.f32 %v182, %v404
    %v406 = vand.u32 %v405, 4294901760
    %v407 = vsub.f32 %v405, %v406
    %v408 = vand.u32 %v407, 4294901760
    %409 = vmatmul.mubr.f32.gmra.mxu0 %v408
    %v410 = vpop.f32.mrf.mxu0
    %v411 = vadd.f32 %v133, %v410
    %v412 = vpop.f32.mrf.mxu0
    %413 = vdwg.mxu0
    %414 = vmatprep.subr.mxu0 0.0
    %415 = vmatpush1.msra.mxu0 0.0
    %416 = vmatprep.subr.mxu0 0.0
    %417 = vmatpush1.msra.mxu0 0.0
    %418 = vmatprep.subr.mxu0 0.0
    %419 = vmatpush1.msra.mxu0 0.0
    %420 = vmatprep.subr.mxu0 0.0
    %421 = vmatpush1.msra.mxu0 0.0
    %422 = vmatprep.subr.mxu0 0.0
    %423 = vmatpush1.msra.mxu0 0.0
    %424 = vmatprep.subr.mxu0 0.0
    %425 = vmatpush1.msra.mxu0 0.0
    %426 = vmatprep.subr.mxu0 0.0
    %427 = vmatpush1.msra.mxu0 0.0
    %428 = vmatprep.subr.mxu0 0.0
    %429 = vmatpush1.msra.mxu0 0.0
    %430 = vmatprep.subr.mxu0 0.0
    %431 = vmatpush1.msra.mxu0 0.0
    %432 = vmatprep.subr.mxu0 0.0
    %433 = vmatpush1.msra.mxu0 0.0
    %434 = vmatprep.subr.mxu0 0.0
    %435 = vmatpush1.msra.mxu0 0.0
    %436 = vmatprep.subr.mxu0 0.0
    %437 = vmatpush1.msra.mxu0 0.0
    %438 = vmatprep.subr.mxu0 0.0
    %439 = vmatpush1.msra.mxu0 0.0
    %440 = vmatprep.subr.mxu0 0.0
    %441 = vmatpush1.msra.mxu0 0.0
    %442 = vmatprep.subr.mxu0 0.0
    %443 = vmatpush1.msra.mxu0 0.0
    %444 = vmatprep.subr.mxu0 0.0
    %v445 = vand.u32 %v186, 4294901760
    %v446 = vsub.f32 %v186, %v445
    %v447 = vand.u32 %v446, 4294901760
    %v448 = vsub.f32 %v446, %v447
    %v449 = vand.u32 %v448, 4294901760
    %450 = vmatpush1.msra.mxu0 %v449
    %451 = vmatprep.subr.mxu0 0.0
    %452 = vmatpush2.msra.mxu0 0.0
    %453 = vmatprep.subr.mxu0 0.0
    %454 = vmatpush2.msra.mxu0 0.0
    %455 = vmatprep.subr.mxu0 0.0
    %456 = vmatpush2.msra.mxu0 0.0
    %457 = vmatprep.subr.mxu0 0.0
    %458 = vmatpush2.msra.mxu0 0.0
    %459 = vmatprep.subr.mxu0 0.0
    %460 = vmatpush2.msra.mxu0 0.0
    %461 = vmatprep.subr.mxu0 0.0
    %462 = vmatpush2.msra.mxu0 0.0
    %463 = vmatprep.subr.mxu0 0.0
    %464 = vmatpush2.msra.mxu0 0.0
    %465 = vmatprep.subr.mxu0 0.0
    %466 = vmatpush2.msra.mxu0 0.0
    %467 = vmatprep.subr.mxu0 0.0
    %468 = vmatpush2.msra.mxu0 0.0
    %469 = vmatprep.subr.mxu0 0.0
    %470 = vmatpush2.msra.mxu0 0.0
    %471 = vmatprep.subr.mxu0 0.0
    %472 = vmatpush2.msra.mxu0 0.0
    %473 = vmatprep.subr.mxu0 0.0
    %474 = vmatpush2.msra.mxu0 0.0
    %475 = vmatprep.subr.mxu0 0.0
    %476 = vmatpush2.msra.mxu0 0.0
    %477 = vmatprep.subr.mxu0 0.0
    %478 = vmatpush2.msra.mxu0 0.0
    %479 = vmatprep.subr.mxu0 0.0
    %480 = vmatpush2.msra.mxu0 0.0
    %481 = vmatprep.subr.mxu0 0.0
    %482 = vmatpush2.msra.mxu0 0.0
    %483 = vmatprep.mubr.f32.mxu0 0.0
    %v484 = vand.u32 %v137, 4294901760
    %485 = vmatmul.mubr.f32.gmra.mxu0 %v484
    %v486 = vpop.f32.mrf.mxu0
    %v487 = vadd.f32 %v261, %v486
    %v488 = vpop.f32.mrf.mxu0
    %489 = vmatprep.mubr.f32.mxu0 0.0
    %v490 = vand.u32 %v140, 4294901760
    %491 = vmatmul.mubr.f32.gmra.mxu0 %v490
    %v492 = vpop.f32.mrf.mxu0
    %v493 = vadd.f32 %v271, %v492
    %v494 = vpop.f32.mrf.mxu0
    %495 = vmatprep.mubr.f32.mxu0 0.0
    %v496 = vand.u32 %v143, 4294901760
    %497 = vmatmul.mubr.f32.gmra.mxu0 %v496
    %v498 = vpop.f32.mrf.mxu0
    %v499 = vadd.f32 %v281, %v498
    %v500 = vpop.f32.mrf.mxu0
    %501 = vmatprep.mubr.f32.mxu0 0.0
    %v502 = vand.u32 %v146, 4294901760
    %503 = vmatmul.mubr.f32.gmra.mxu0 %v502
    %v504 = vpop.f32.mrf.mxu0
    %v505 = vadd.f32 %v291, %v504
    %v506 = vpop.f32.mrf.mxu0
    %507 = vmatprep.mubr.f32.mxu0 0.0
    %v508 = vand.u32 %v149, 4294901760
    %509 = vmatmul.mubr.f32.gmra.mxu0 %v508
    %v510 = vpop.f32.mrf.mxu0
    %v511 = vadd.f32 %v301, %v510
    %v512 = vpop.f32.mrf.mxu0
    %513 = vmatprep.mubr.f32.mxu0 0.0
    %v514 = vand.u32 %v152, 4294901760
    %515 = vmatmul.mubr.f32.gmra.mxu0 %v514
    %v516 = vpop.f32.mrf.mxu0
    %v517 = vadd.f32 %v311, %v516
    %v518 = vpop.f32.mrf.mxu0
    %519 = vmatprep.mubr.f32.mxu0 0.0
    %v520 = vand.u32 %v155, 4294901760
    %521 = vmatmul.mubr.f32.gmra.mxu0 %v520
    %v522 = vpop.f32.mrf.mxu0
    %v523 = vadd.f32 %v321, %v522
    %v524 = vpop.f32.mrf.mxu0
    %525 = vmatprep.mubr.f32.mxu0 0.0
    %v526 = vand.u32 %v158, 4294901760
    %527 = vmatmul.mubr.f32.gmra.mxu0 %v526
    %v528 = vpop.f32.mrf.mxu0
    %v529 = vadd.f32 %v331, %v528
    %v530 = vpop.f32.mrf.mxu0
    %531 = vmatprep.mubr.f32.mxu0 0.0
    %v532 = vand.u32 %v161, 4294901760
    %533 = vmatmul.mubr.f32.gmra.mxu0 %v532
    %v534 = vpop.f32.mrf.mxu0
    %v535 = vadd.f32 %v341, %v534
    %v536 = vpop.f32.mrf.mxu0
    %537 = vmatprep.mubr.f32.mxu0 0.0
    %v538 = vand.u32 %v164, 4294901760
    %539 = vmatmul.mubr.f32.gmra.mxu0 %v538
    %v540 = vpop.f32.mrf.mxu0
    %v541 = vadd.f32 %v351, %v540
    %v542 = vpop.f32.mrf.mxu0
    %543 = vmatprep.mubr.f32.mxu0 0.0
    %v544 = vand.u32 %v167, 4294901760
    %545 = vmatmul.mubr.f32.gmra.mxu0 %v544
    %v546 = vpop.f32.mrf.mxu0
    %v547 = vadd.f32 %v361, %v546
    %v548 = vpop.f32.mrf.mxu0
    %549 = vmatprep.mubr.f32.mxu0 0.0
    %v550 = vand.u32 %v170, 4294901760
    %551 = vmatmul.mubr.f32.gmra.mxu0 %v550
    %v552 = vpop.f32.mrf.mxu0
    %v553 = vadd.f32 %v371, %v552
    %v554 = vpop.f32.mrf.mxu0
    %555 = vmatprep.mubr.f32.mxu0 0.0
    %v556 = vand.u32 %v173, 4294901760
    %557 = vmatmul.mubr.f32.gmra.mxu0 %v556
    %v558 = vpop.f32.mrf.mxu0
    %v559 = vadd.f32 %v381, %v558
    %v560 = vpop.f32.mrf.mxu0
    %561 = vmatprep.mubr.f32.mxu0 0.0
    %v562 = vand.u32 %v176, 4294901760
    %563 = vmatmul.mubr.f32.gmra.mxu0 %v562
    %v564 = vpop.f32.mrf.mxu0
    %v565 = vadd.f32 %v391, %v564
    %v566 = vpop.f32.mrf.mxu0
    %567 = vmatprep.mubr.f32.mxu0 0.0
    %v568 = vand.u32 %v179, 4294901760
    %569 = vmatmul.mubr.f32.gmra.mxu0 %v568
    %v570 = vpop.f32.mrf.mxu0
    %v571 = vadd.f32 %v401, %v570
    %v572 = vpop.f32.mrf.mxu0
    %573 = vmatprep.mubr.f32.mxu0 0.0
    %v574 = vand.u32 %v182, 4294901760
    %575 = vmatmul.mubr.f32.gmra.mxu0 %v574
    %v576 = vpop.f32.mrf.mxu0
    %v577 = vadd.f32 %v411, %v576
    %v578 = vpop.f32.mrf.mxu0
    %579 = vdwg.mxu0
    %580 = vmatprep.subr.mxu0 0.0
    %581 = vmatpush1.msra.mxu0 0.0
    %582 = vmatprep.subr.mxu0 0.0
    %583 = vmatpush1.msra.mxu0 0.0
    %584 = vmatprep.subr.mxu0 0.0
    %585 = vmatpush1.msra.mxu0 0.0
    %586 = vmatprep.subr.mxu0 0.0
    %587 = vmatpush1.msra.mxu0 0.0
    %588 = vmatprep.subr.mxu0 0.0
    %589 = vmatpush1.msra.mxu0 0.0
    %590 = vmatprep.subr.mxu0 0.0
    %591 = vmatpush1.msra.mxu0 0.0
    %592 = vmatprep.subr.mxu0 0.0
    %593 = vmatpush1.msra.mxu0 0.0
    %594 = vmatprep.subr.mxu0 0.0
    %595 = vmatpush1.msra.mxu0 0.0
    %596 = vmatprep.subr.mxu0 0.0
    %597 = vmatpush1.msra.mxu0 0.0
    %598 = vmatprep.subr.mxu0 0.0
    %599 = vmatpush1.msra.mxu0 0.0
    %600 = vmatprep.subr.mxu0 0.0
    %601 = vmatpush1.msra.mxu0 0.0
    %602 = vmatprep.subr.mxu0 0.0
    %603 = vmatpush1.msra.mxu0 0.0
    %604 = vmatprep.subr.mxu0 0.0
    %605 = vmatpush1.msra.mxu0 0.0
    %606 = vmatprep.subr.mxu0 0.0
    %607 = vmatpush1.msra.mxu0 0.0
    %608 = vmatprep.subr.mxu0 0.0
    %609 = vmatpush1.msra.mxu0 0.0
    %610 = vmatprep.subr.mxu0 0.0
    %v611 = vand.u32 %v186, 4294901760
    %v612 = vsub.f32 %v186, %v611
    %613 = vmatpush1.msra.mxu0 %v612
    %614 = vmatprep.subr.mxu0 0.0
    %615 = vmatpush2.msra.mxu0 0.0
    %616 = vmatprep.subr.mxu0 0.0
    %617 = vmatpush2.msra.mxu0 0.0
    %618 = vmatprep.subr.mxu0 0.0
    %619 = vmatpush2.msra.mxu0 0.0
    %620 = vmatprep.subr.mxu0 0.0
    %621 = vmatpush2.msra.mxu0 0.0
    %622 = vmatprep.subr.mxu0 0.0
    %623 = vmatpush2.msra.mxu0 0.0
    %624 = vmatprep.subr.mxu0 0.0
    %625 = vmatpush2.msra.mxu0 0.0
    %626 = vmatprep.subr.mxu0 0.0
    %627 = vmatpush2.msra.mxu0 0.0
    %628 = vmatprep.subr.mxu0 0.0
    %629 = vmatpush2.msra.mxu0 0.0
    %630 = vmatprep.subr.mxu0 0.0
    %631 = vmatpush2.msra.mxu0 0.0
    %632 = vmatprep.subr.mxu0 0.0
    %633 = vmatpush2.msra.mxu0 0.0
    %634 = vmatprep.subr.mxu0 0.0
    %635 = vmatpush2.msra.mxu0 0.0
    %636 = vmatprep.subr.mxu0 0.0
    %637 = vmatpush2.msra.mxu0 0.0
    %638 = vmatprep.subr.mxu0 0.0
    %639 = vmatpush2.msra.mxu0 0.0
    %640 = vmatprep.subr.mxu0 0.0
    %641 = vmatpush2.msra.mxu0 0.0
    %642 = vmatprep.subr.mxu0 0.0
    %643 = vmatpush2.msra.mxu0 0.0
    %644 = vmatprep.subr.mxu0 0.0
    %645 = vmatpush2.msra.mxu0 0.0
    %646 = vmatprep.mubr.f32.mxu0 0.0
    %v647 = vand.u32 %v137, 4294901760
    %v648 = vsub.f32 %v137, %v647
    %649 = vmatmul.mubr.f32.gmra.mxu0 %v648
    %v650 = vpop.f32.mrf.mxu0
    %v651 = vadd.f32 %v487, %v650
    %v652 = vpop.f32.mrf.mxu0
    %653 = vmatprep.mubr.f32.mxu0 0.0
    %v654 = vand.u32 %v140, 4294901760
    %v655 = vsub.f32 %v140, %v654
    %656 = vmatmul.mubr.f32.gmra.mxu0 %v655
    %v657 = vpop.f32.mrf.mxu0
    %v658 = vadd.f32 %v493, %v657
    %v659 = vpop.f32.mrf.mxu0
    %660 = vmatprep.mubr.f32.mxu0 0.0
    %v661 = vand.u32 %v143, 4294901760
    %v662 = vsub.f32 %v143, %v661
    %663 = vmatmul.mubr.f32.gmra.mxu0 %v662
    %v664 = vpop.f32.mrf.mxu0
    %v665 = vadd.f32 %v499, %v664
    %v666 = vpop.f32.mrf.mxu0
    %667 = vmatprep.mubr.f32.mxu0 0.0
    %v668 = vand.u32 %v146, 4294901760
    %v669 = vsub.f32 %v146, %v668
    %670 = vmatmul.mubr.f32.gmra.mxu0 %v669
    %v671 = vpop.f32.mrf.mxu0
    %v672 = vadd.f32 %v505, %v671
    %v673 = vpop.f32.mrf.mxu0
    %674 = vmatprep.mubr.f32.mxu0 0.0
    %v675 = vand.u32 %v149, 4294901760
    %v676 = vsub.f32 %v149, %v675
    %677 = vmatmul.mubr.f32.gmra.mxu0 %v676
    %v678 = vpop.f32.mrf.mxu0
    %v679 = vadd.f32 %v511, %v678
    %v680 = vpop.f32.mrf.mxu0
    %681 = vmatprep.mubr.f32.mxu0 0.0
    %v682 = vand.u32 %v152, 4294901760
    %v683 = vsub.f32 %v152, %v682
    %684 = vmatmul.mubr.f32.gmra.mxu0 %v683
    %v685 = vpop.f32.mrf.mxu0
    %v686 = vadd.f32 %v517, %v685
    %v687 = vpop.f32.mrf.mxu0
    %688 = vmatprep.mubr.f32.mxu0 0.0
    %v689 = vand.u32 %v155, 4294901760
    %v690 = vsub.f32 %v155, %v689
    %691 = vmatmul.mubr.f32.gmra.mxu0 %v690
    %v692 = vpop.f32.mrf.mxu0
    %v693 = vadd.f32 %v523, %v692
    %v694 = vpop.f32.mrf.mxu0
    %695 = vmatprep.mubr.f32.mxu0 0.0
    %v696 = vand.u32 %v158, 4294901760
    %v697 = vsub.f32 %v158, %v696
    %698 = vmatmul.mubr.f32.gmra.mxu0 %v697
    %v699 = vpop.f32.mrf.mxu0
    %v700 = vadd.f32 %v529, %v699
    %v701 = vpop.f32.mrf.mxu0
    %702 = vmatprep.mubr.f32.mxu0 0.0
    %v703 = vand.u32 %v161, 4294901760
    %v704 = vsub.f32 %v161, %v703
    %705 = vmatmul.mubr.f32.gmra.mxu0 %v704
    %v706 = vpop.f32.mrf.mxu0
    %v707 = vadd.f32 %v535, %v706
    %v708 = vpop.f32.mrf.mxu0
    %709 = vmatprep.mubr.f32.mxu0 0.0
    %v710 = vand.u32 %v164, 4294901760
    %v711 = vsub.f32 %v164, %v710
    %712 = vmatmul.mubr.f32.gmra.mxu0 %v711
    %v713 = vpop.f32.mrf.mxu0
    %v714 = vadd.f32 %v541, %v713
    %v715 = vpop.f32.mrf.mxu0
    %716 = vmatprep.mubr.f32.mxu0 0.0
    %v717 = vand.u32 %v167, 4294901760
    %v718 = vsub.f32 %v167, %v717
    %719 = vmatmul.mubr.f32.gmra.mxu0 %v718
    %v720 = vpop.f32.mrf.mxu0
    %v721 = vadd.f32 %v547, %v720
    %v722 = vpop.f32.mrf.mxu0
    %723 = vmatprep.mubr.f32.mxu0 0.0
    %v724 = vand.u32 %v170, 4294901760
    %v725 = vsub.f32 %v170, %v724
    %726 = vmatmul.mubr.f32.gmra.mxu0 %v725
    %v727 = vpop.f32.mrf.mxu0
    %v728 = vadd.f32 %v553, %v727
    %v729 = vpop.f32.mrf.mxu0
    %730 = vmatprep.mubr.f32.mxu0 0.0
    %v731 = vand.u32 %v173, 4294901760
    %v732 = vsub.f32 %v173, %v731
    %733 = vmatmul.mubr.f32.gmra.mxu0 %v732
    %v734 = vpop.f32.mrf.mxu0
    %v735 = vadd.f32 %v559, %v734
    %v736 = vpop.f32.mrf.mxu0
    %737 = vmatprep.mubr.f32.mxu0 0.0
    %v738 = vand.u32 %v176, 4294901760
    %v739 = vsub.f32 %v176, %v738
    %740 = vmatmul.mubr.f32.gmra.mxu0 %v739
    %v741 = vpop.f32.mrf.mxu0
    %v742 = vadd.f32 %v565, %v741
    %v743 = vpop.f32.mrf.mxu0
    %744 = vmatprep.mubr.f32.mxu0 0.0
    %v745 = vand.u32 %v179, 4294901760
    %v746 = vsub.f32 %v179, %v745
    %747 = vmatmul.mubr.f32.gmra.mxu0 %v746
    %v748 = vpop.f32.mrf.mxu0
    %v749 = vadd.f32 %v571, %v748
    %v750 = vpop.f32.mrf.mxu0
    %751 = vmatprep.mubr.f32.mxu0 0.0
    %v752 = vand.u32 %v182, 4294901760
    %v753 = vsub.f32 %v182, %v752
    %754 = vmatmul.mubr.f32.gmra.mxu0 %v753
    %v755 = vpop.f32.mrf.mxu0
    %v756 = vadd.f32 %v577, %v755
    %v757 = vpop.f32.mrf.mxu0
    %758 = vdwg.mxu0
    %759 = vmatprep.subr.mxu0 0.0
    %760 = vmatpush1.msra.mxu0 0.0
    %761 = vmatprep.subr.mxu0 0.0
    %762 = vmatpush1.msra.mxu0 0.0
    %763 = vmatprep.subr.mxu0 0.0
    %764 = vmatpush1.msra.mxu0 0.0
    %765 = vmatprep.subr.mxu0 0.0
    %766 = vmatpush1.msra.mxu0 0.0
    %767 = vmatprep.subr.mxu0 0.0
    %768 = vmatpush1.msra.mxu0 0.0
    %769 = vmatprep.subr.mxu0 0.0
    %770 = vmatpush1.msra.mxu0 0.0
    %771 = vmatprep.subr.mxu0 0.0
    %772 = vmatpush1.msra.mxu0 0.0
    %773 = vmatprep.subr.mxu0 0.0
    %774 = vmatpush1.msra.mxu0 0.0
    %775 = vmatprep.subr.mxu0 0.0
    %776 = vmatpush1.msra.mxu0 0.0
    %777 = vmatprep.subr.mxu0 0.0
    %778 = vmatpush1.msra.mxu0 0.0
    %779 = vmatprep.subr.mxu0 0.0
    %780 = vmatpush1.msra.mxu0 0.0
    %781 = vmatprep.subr.mxu0 0.0
    %782 = vmatpush1.msra.mxu0 0.0
    %783 = vmatprep.subr.mxu0 0.0
    %784 = vmatpush1.msra.mxu0 0.0
    %785 = vmatprep.subr.mxu0 0.0
    %786 = vmatpush1.msra.mxu0 0.0
    %787 = vmatprep.subr.mxu0 0.0
    %788 = vmatpush1.msra.mxu0 0.0
    %789 = vmatprep.subr.mxu0 0.0
    %v790 = vand.u32 %v186, 4294901760
    %791 = vmatpush1.msra.mxu0 %v790
    %792 = vmatprep.subr.mxu0 0.0
    %793 = vmatpush2.msra.mxu0 0.0
    %794 = vmatprep.subr.mxu0 0.0
    %795 = vmatpush2.msra.mxu0 0.0
    %796 = vmatprep.subr.mxu0 0.0
    %797 = vmatpush2.msra.mxu0 0.0
    %798 = vmatprep.subr.mxu0 0.0
    %799 = vmatpush2.msra.mxu0 0.0
    %800 = vmatprep.subr.mxu0 0.0
    %801 = vmatpush2.msra.mxu0 0.0
    %802 = vmatprep.subr.mxu0 0.0
    %803 = vmatpush2.msra.mxu0 0.0
    %804 = vmatprep.subr.mxu0 0.0
    %805 = vmatpush2.msra.mxu0 0.0
    %806 = vmatprep.subr.mxu0 0.0
    %807 = vmatpush2.msra.mxu0 0.0
    %808 = vmatprep.subr.mxu0 0.0
    %809 = vmatpush2.msra.mxu0 0.0
    %810 = vmatprep.subr.mxu0 0.0
    %811 = vmatpush2.msra.mxu0 0.0
    %812 = vmatprep.subr.mxu0 0.0
    %813 = vmatpush2.msra.mxu0 0.0
    %814 = vmatprep.subr.mxu0 0.0
    %815 = vmatpush2.msra.mxu0 0.0
    %816 = vmatprep.subr.mxu0 0.0
    %817 = vmatpush2.msra.mxu0 0.0
    %818 = vmatprep.subr.mxu0 0.0
    %819 = vmatpush2.msra.mxu0 0.0
    %820 = vmatprep.subr.mxu0 0.0
    %821 = vmatpush2.msra.mxu0 0.0
    %822 = vmatprep.subr.mxu0 0.0
    %823 = vmatpush2.msra.mxu0 0.0
    %824 = vmatprep.mubr.f32.mxu0 0.0
    %v825 = vand.u32 %v137, 4294901760
    %v826 = vsub.f32 %v137, %v825
    %v827 = vand.u32 %v826, 4294901760
    %828 = vmatmul.mubr.f32.gmra.mxu0 %v827
    %v829 = vpop.f32.mrf.mxu0
    %v830 = vadd.f32 %v651, %v829
    %v831 = vpop.f32.mrf.mxu0
    %832 = vmatprep.mubr.f32.mxu0 0.0
    %v833 = vand.u32 %v140, 4294901760
    %v834 = vsub.f32 %v140, %v833
    %v835 = vand.u32 %v834, 4294901760
    %836 = vmatmul.mubr.f32.gmra.mxu0 %v835
    %v837 = vpop.f32.mrf.mxu0
    %v838 = vadd.f32 %v658, %v837
    %v839 = vpop.f32.mrf.mxu0
    %840 = vmatprep.mubr.f32.mxu0 0.0
    %v841 = vand.u32 %v143, 4294901760
    %v842 = vsub.f32 %v143, %v841
    %v843 = vand.u32 %v842, 4294901760
    %844 = vmatmul.mubr.f32.gmra.mxu0 %v843
    %v845 = vpop.f32.mrf.mxu0
    %v846 = vadd.f32 %v665, %v845
    %v847 = vpop.f32.mrf.mxu0
    %848 = vmatprep.mubr.f32.mxu0 0.0
    %v849 = vand.u32 %v146, 4294901760
    %v850 = vsub.f32 %v146, %v849
    %v851 = vand.u32 %v850, 4294901760
    %852 = vmatmul.mubr.f32.gmra.mxu0 %v851
    %v853 = vpop.f32.mrf.mxu0
    %v854 = vadd.f32 %v672, %v853
    %v855 = vpop.f32.mrf.mxu0
    %856 = vmatprep.mubr.f32.mxu0 0.0
    %v857 = vand.u32 %v149, 4294901760
    %v858 = vsub.f32 %v149, %v857
    %v859 = vand.u32 %v858, 4294901760
    %860 = vmatmul.mubr.f32.gmra.mxu0 %v859
    %v861 = vpop.f32.mrf.mxu0
    %v862 = vadd.f32 %v679, %v861
    %v863 = vpop.f32.mrf.mxu0
    %864 = vmatprep.mubr.f32.mxu0 0.0
    %v865 = vand.u32 %v152, 4294901760
    %v866 = vsub.f32 %v152, %v865
    %v867 = vand.u32 %v866, 4294901760
    %868 = vmatmul.mubr.f32.gmra.mxu0 %v867
    %v869 = vpop.f32.mrf.mxu0
    %v870 = vadd.f32 %v686, %v869
    %v871 = vpop.f32.mrf.mxu0
    %872 = vmatprep.mubr.f32.mxu0 0.0
    %v873 = vand.u32 %v155, 4294901760
    %v874 = vsub.f32 %v155, %v873
    %v875 = vand.u32 %v874, 4294901760
    %876 = vmatmul.mubr.f32.gmra.mxu0 %v875
    %v877 = vpop.f32.mrf.mxu0
    %v878 = vadd.f32 %v693, %v877
    %v879 = vpop.f32.mrf.mxu0
    %880 = vmatprep.mubr.f32.mxu0 0.0
    %v881 = vand.u32 %v158, 4294901760
    %v882 = vsub.f32 %v158, %v881
    %v883 = vand.u32 %v882, 4294901760
    %884 = vmatmul.mubr.f32.gmra.mxu0 %v883
    %v885 = vpop.f32.mrf.mxu0
    %v886 = vadd.f32 %v700, %v885
    %v887 = vpop.f32.mrf.mxu0
    %888 = vmatprep.mubr.f32.mxu0 0.0
    %v889 = vand.u32 %v161, 4294901760
    %v890 = vsub.f32 %v161, %v889
    %v891 = vand.u32 %v890, 4294901760
    %892 = vmatmul.mubr.f32.gmra.mxu0 %v891
    %v893 = vpop.f32.mrf.mxu0
    %v894 = vadd.f32 %v707, %v893
    %v895 = vpop.f32.mrf.mxu0
    %896 = vmatprep.mubr.f32.mxu0 0.0
    %v897 = vand.u32 %v164, 4294901760
    %v898 = vsub.f32 %v164, %v897
    %v899 = vand.u32 %v898, 4294901760
    %900 = vmatmul.mubr.f32.gmra.mxu0 %v899
    %v901 = vpop.f32.mrf.mxu0
    %v902 = vadd.f32 %v714, %v901
    %v903 = vpop.f32.mrf.mxu0
    %904 = vmatprep.mubr.f32.mxu0 0.0
    %v905 = vand.u32 %v167, 4294901760
    %v906 = vsub.f32 %v167, %v905
    %v907 = vand.u32 %v906, 4294901760
    %908 = vmatmul.mubr.f32.gmra.mxu0 %v907
    %v909 = vpop.f32.mrf.mxu0
    %v910 = vadd.f32 %v721, %v909
    %v911 = vpop.f32.mrf.mxu0
    %912 = vmatprep.mubr.f32.mxu0 0.0
    %v913 = vand.u32 %v170, 4294901760
    %v914 = vsub.f32 %v170, %v913
    %v915 = vand.u32 %v914, 4294901760
    %916 = vmatmul.mubr.f32.gmra.mxu0 %v915
    %v917 = vpop.f32.mrf.mxu0
    %v918 = vadd.f32 %v728, %v917
    %v919 = vpop.f32.mrf.mxu0
    %920 = vmatprep.mubr.f32.mxu0 0.0
    %v921 = vand.u32 %v173, 4294901760
    %v922 = vsub.f32 %v173, %v921
    %v923 = vand.u32 %v922, 4294901760
    %924 = vmatmul.mubr.f32.gmra.mxu0 %v923
    %v925 = vpop.f32.mrf.mxu0
    %v926 = vadd.f32 %v735, %v925
    %v927 = vpop.f32.mrf.mxu0
    %928 = vmatprep.mubr.f32.mxu0 0.0
    %v929 = vand.u32 %v176, 4294901760
    %v930 = vsub.f32 %v176, %v929
    %v931 = vand.u32 %v930, 4294901760
    %932 = vmatmul.mubr.f32.gmra.mxu0 %v931
    %v933 = vpop.f32.mrf.mxu0
    %v934 = vadd.f32 %v742, %v933
    %v935 = vpop.f32.mrf.mxu0
    %936 = vmatprep.mubr.f32.mxu0 0.0
    %v937 = vand.u32 %v179, 4294901760
    %v938 = vsub.f32 %v179, %v937
    %v939 = vand.u32 %v938, 4294901760
    %940 = vmatmul.mubr.f32.gmra.mxu0 %v939
    %v941 = vpop.f32.mrf.mxu0
    %v942 = vadd.f32 %v749, %v941
    %v943 = vpop.f32.mrf.mxu0
    %944 = vmatprep.mubr.f32.mxu0 0.0
    %v945 = vand.u32 %v182, 4294901760
    %v946 = vsub.f32 %v182, %v945
    %v947 = vand.u32 %v946, 4294901760
    %948 = vmatmul.mubr.f32.gmra.mxu0 %v947
    %v949 = vpop.f32.mrf.mxu0
    %v950 = vadd.f32 %v756, %v949
    %v951 = vpop.f32.mrf.mxu0
    %952 = vdwg.mxu0
    %953 = vmatprep.subr.mxu0 0.0
    %954 = vmatpush1.msra.mxu0 0.0
    %955 = vmatprep.subr.mxu0 0.0
    %956 = vmatpush1.msra.mxu0 0.0
    %957 = vmatprep.subr.mxu0 0.0
    %958 = vmatpush1.msra.mxu0 0.0
    %959 = vmatprep.subr.mxu0 0.0
    %960 = vmatpush1.msra.mxu0 0.0
    %961 = vmatprep.subr.mxu0 0.0
    %962 = vmatpush1.msra.mxu0 0.0
    %963 = vmatprep.subr.mxu0 0.0
    %964 = vmatpush1.msra.mxu0 0.0
    %965 = vmatprep.subr.mxu0 0.0
    %966 = vmatpush1.msra.mxu0 0.0
    %967 = vmatprep.subr.mxu0 0.0
    %968 = vmatpush1.msra.mxu0 0.0
    %969 = vmatprep.subr.mxu0 0.0
    %970 = vmatpush1.msra.mxu0 0.0
    %971 = vmatprep.subr.mxu0 0.0
    %972 = vmatpush1.msra.mxu0 0.0
    %973 = vmatprep.subr.mxu0 0.0
    %974 = vmatpush1.msra.mxu0 0.0
    %975 = vmatprep.subr.mxu0 0.0
    %976 = vmatpush1.msra.mxu0 0.0
    %977 = vmatprep.subr.mxu0 0.0
    %978 = vmatpush1.msra.mxu0 0.0
    %979 = vmatprep.subr.mxu0 0.0
    %980 = vmatpush1.msra.mxu0 0.0
    %981 = vmatprep.subr.mxu0 0.0
    %982 = vmatpush1.msra.mxu0 0.0
    %983 = vmatprep.subr.mxu0 0.0
    %v984 = vand.u32 %v186, 4294901760
    %v985 = vsub.f32 %v186, %v984
    %v986 = vand.u32 %v985, 4294901760
    %987 = vmatpush1.msra.mxu0 %v986
    %988 = vmatprep.subr.mxu0 0.0
    %989 = vmatpush2.msra.mxu0 0.0
    %990 = vmatprep.subr.mxu0 0.0
    %991 = vmatpush2.msra.mxu0 0.0
    %992 = vmatprep.subr.mxu0 0.0
    %993 = vmatpush2.msra.mxu0 0.0
    %994 = vmatprep.subr.mxu0 0.0
    %995 = vmatpush2.msra.mxu0 0.0
    %996 = vmatprep.subr.mxu0 0.0
    %997 = vmatpush2.msra.mxu0 0.0
    %998 = vmatprep.subr.mxu0 0.0
    %999 = vmatpush2.msra.mxu0 0.0
    %1000 = vmatprep.subr.mxu0 0.0
    %1001 = vmatpush2.msra.mxu0 0.0
    %1002 = vmatprep.subr.mxu0 0.0
    %1003 = vmatpush2.msra.mxu0 0.0
    %1004 = vmatprep.subr.mxu0 0.0
    %1005 = vmatpush2.msra.mxu0 0.0
    %1006 = vmatprep.subr.mxu0 0.0
    %1007 = vmatpush2.msra.mxu0 0.0
    %1008 = vmatprep.subr.mxu0 0.0
    %1009 = vmatpush2.msra.mxu0 0.0
    %1010 = vmatprep.subr.mxu0 0.0
    %1011 = vmatpush2.msra.mxu0 0.0
    %1012 = vmatprep.subr.mxu0 0.0
    %1013 = vmatpush2.msra.mxu0 0.0
    %1014 = vmatprep.subr.mxu0 0.0
    %1015 = vmatpush2.msra.mxu0 0.0
    %1016 = vmatprep.subr.mxu0 0.0
    %1017 = vmatpush2.msra.mxu0 0.0
    %1018 = vmatprep.subr.mxu0 0.0
    %1019 = vmatpush2.msra.mxu0 0.0
    %1020 = vmatprep.mubr.f32.mxu0 0.0
    %v1021 = vand.u32 %v137, 4294901760
    %1022 = vmatmul.mubr.f32.gmra.mxu0 %v1021
    %v1023 = vpop.f32.mrf.mxu0
    %v1024 = vadd.f32 %v830, %v1023
    %v1025 = vpop.f32.mrf.mxu0
    %1026 = vmatprep.mubr.f32.mxu0 0.0
    %v1027 = vand.u32 %v140, 4294901760
    %1028 = vmatmul.mubr.f32.gmra.mxu0 %v1027
    %v1029 = vpop.f32.mrf.mxu0
    %v1030 = vadd.f32 %v838, %v1029
    %v1031 = vpop.f32.mrf.mxu0
    %1032 = vmatprep.mubr.f32.mxu0 0.0
    %v1033 = vand.u32 %v143, 4294901760
    %1034 = vmatmul.mubr.f32.gmra.mxu0 %v1033
    %v1035 = vpop.f32.mrf.mxu0
    %v1036 = vadd.f32 %v846, %v1035
    %v1037 = vpop.f32.mrf.mxu0
    %1038 = vmatprep.mubr.f32.mxu0 0.0
    %v1039 = vand.u32 %v146, 4294901760
    %1040 = vmatmul.mubr.f32.gmra.mxu0 %v1039
    %v1041 = vpop.f32.mrf.mxu0
    %v1042 = vadd.f32 %v854, %v1041
    %v1043 = vpop.f32.mrf.mxu0
    %1044 = vmatprep.mubr.f32.mxu0 0.0
    %v1045 = vand.u32 %v149, 4294901760
    %1046 = vmatmul.mubr.f32.gmra.mxu0 %v1045
    %v1047 = vpop.f32.mrf.mxu0
    %v1048 = vadd.f32 %v862, %v1047
    %v1049 = vpop.f32.mrf.mxu0
    %1050 = vmatprep.mubr.f32.mxu0 0.0
    %v1051 = vand.u32 %v152, 4294901760
    %1052 = vmatmul.mubr.f32.gmra.mxu0 %v1051
    %v1053 = vpop.f32.mrf.mxu0
    %v1054 = vadd.f32 %v870, %v1053
    %v1055 = vpop.f32.mrf.mxu0
    %1056 = vmatprep.mubr.f32.mxu0 0.0
    %v1057 = vand.u32 %v155, 4294901760
    %1058 = vmatmul.mubr.f32.gmra.mxu0 %v1057
    %v1059 = vpop.f32.mrf.mxu0
    %v1060 = vadd.f32 %v878, %v1059
    %v1061 = vpop.f32.mrf.mxu0
    %1062 = vmatprep.mubr.f32.mxu0 0.0
    %v1063 = vand.u32 %v158, 4294901760
    %1064 = vmatmul.mubr.f32.gmra.mxu0 %v1063
    %v1065 = vpop.f32.mrf.mxu0
    %v1066 = vadd.f32 %v886, %v1065
    %v1067 = vpop.f32.mrf.mxu0
    %1068 = vmatprep.mubr.f32.mxu0 0.0
    %v1069 = vand.u32 %v161, 4294901760
    %1070 = vmatmul.mubr.f32.gmra.mxu0 %v1069
    %v1071 = vpop.f32.mrf.mxu0
    %v1072 = vadd.f32 %v894, %v1071
    %v1073 = vpop.f32.mrf.mxu0
    %1074 = vmatprep.mubr.f32.mxu0 0.0
    %v1075 = vand.u32 %v164, 4294901760
    %1076 = vmatmul.mubr.f32.gmra.mxu0 %v1075
    %v1077 = vpop.f32.mrf.mxu0
    %v1078 = vadd.f32 %v902, %v1077
    %v1079 = vpop.f32.mrf.mxu0
    %1080 = vmatprep.mubr.f32.mxu0 0.0
    %v1081 = vand.u32 %v167, 4294901760
    %1082 = vmatmul.mubr.f32.gmra.mxu0 %v1081
    %v1083 = vpop.f32.mrf.mxu0
    %v1084 = vadd.f32 %v910, %v1083
    %v1085 = vpop.f32.mrf.mxu0
    %1086 = vmatprep.mubr.f32.mxu0 0.0
    %v1087 = vand.u32 %v170, 4294901760
    %1088 = vmatmul.mubr.f32.gmra.mxu0 %v1087
    %v1089 = vpop.f32.mrf.mxu0
    %v1090 = vadd.f32 %v918, %v1089
    %v1091 = vpop.f32.mrf.mxu0
    %1092 = vmatprep.mubr.f32.mxu0 0.0
    %v1093 = vand.u32 %v173, 4294901760
    %1094 = vmatmul.mubr.f32.gmra.mxu0 %v1093
    %v1095 = vpop.f32.mrf.mxu0
    %v1096 = vadd.f32 %v926, %v1095
    %v1097 = vpop.f32.mrf.mxu0
    %1098 = vmatprep.mubr.f32.mxu0 0.0
    %v1099 = vand.u32 %v176, 4294901760
    %1100 = vmatmul.mubr.f32.gmra.mxu0 %v1099
    %v1101 = vpop.f32.mrf.mxu0
    %v1102 = vadd.f32 %v934, %v1101
    %v1103 = vpop.f32.mrf.mxu0
    %1104 = vmatprep.mubr.f32.mxu0 0.0
    %v1105 = vand.u32 %v179, 4294901760
    %1106 = vmatmul.mubr.f32.gmra.mxu0 %v1105
    %v1107 = vpop.f32.mrf.mxu0
    %v1108 = vadd.f32 %v942, %v1107
    %v1109 = vpop.f32.mrf.mxu0
    %1110 = vmatprep.mubr.f32.mxu0 0.0
    %v1111 = vand.u32 %v182, 4294901760
    %1112 = vmatmul.mubr.f32.gmra.mxu0 %v1111
    %v1113 = vpop.f32.mrf.mxu0
    %v1114 = vadd.f32 %v950, %v1113
    %v1115 = vpop.f32.mrf.mxu0
    %1116 = vdwg.mxu0
    %1117 = vmatprep.subr.mxu0 0.0
    %1118 = vmatpush1.msra.mxu0 0.0
    %1119 = vmatprep.subr.mxu0 0.0
    %1120 = vmatpush1.msra.mxu0 0.0
    %1121 = vmatprep.subr.mxu0 0.0
    %1122 = vmatpush1.msra.mxu0 0.0
    %1123 = vmatprep.subr.mxu0 0.0
    %1124 = vmatpush1.msra.mxu0 0.0
    %1125 = vmatprep.subr.mxu0 0.0
    %1126 = vmatpush1.msra.mxu0 0.0
    %1127 = vmatprep.subr.mxu0 0.0
    %1128 = vmatpush1.msra.mxu0 0.0
    %1129 = vmatprep.subr.mxu0 0.0
    %1130 = vmatpush1.msra.mxu0 0.0
    %1131 = vmatprep.subr.mxu0 0.0
    %1132 = vmatpush1.msra.mxu0 0.0
    %1133 = vmatprep.subr.mxu0 0.0
    %1134 = vmatpush1.msra.mxu0 0.0
    %1135 = vmatprep.subr.mxu0 0.0
    %1136 = vmatpush1.msra.mxu0 0.0
    %1137 = vmatprep.subr.mxu0 0.0
    %1138 = vmatpush1.msra.mxu0 0.0
    %1139 = vmatprep.subr.mxu0 0.0
    %1140 = vmatpush1.msra.mxu0 0.0
    %1141 = vmatprep.subr.mxu0 0.0
    %1142 = vmatpush1.msra.mxu0 0.0
    %1143 = vmatprep.subr.mxu0 0.0
    %1144 = vmatpush1.msra.mxu0 0.0
    %1145 = vmatprep.subr.mxu0 0.0
    %1146 = vmatpush1.msra.mxu0 0.0
    %1147 = vmatprep.subr.mxu0 0.0
    %v1148 = vand.u32 %v186, 4294901760
    %1149 = vmatpush1.msra.mxu0 %v1148
    %1150 = vmatprep.subr.mxu0 0.0
    %1151 = vmatpush2.msra.mxu0 0.0
    %1152 = vmatprep.subr.mxu0 0.0
    %1153 = vmatpush2.msra.mxu0 0.0
    %1154 = vmatprep.subr.mxu0 0.0
    %1155 = vmatpush2.msra.mxu0 0.0
    %1156 = vmatprep.subr.mxu0 0.0
    %1157 = vmatpush2.msra.mxu0 0.0
    %1158 = vmatprep.subr.mxu0 0.0
    %1159 = vmatpush2.msra.mxu0 0.0
    %1160 = vmatprep.subr.mxu0 0.0
    %1161 = vmatpush2.msra.mxu0 0.0
    %1162 = vmatprep.subr.mxu0 0.0
    %1163 = vmatpush2.msra.mxu0 0.0
    %1164 = vmatprep.subr.mxu0 0.0
    %1165 = vmatpush2.msra.mxu0 0.0
    %1166 = vmatprep.subr.mxu0 0.0
    %1167 = vmatpush2.msra.mxu0 0.0
    %1168 = vmatprep.subr.mxu0 0.0
    %1169 = vmatpush2.msra.mxu0 0.0
    %1170 = vmatprep.subr.mxu0 0.0
    %1171 = vmatpush2.msra.mxu0 0.0
    %1172 = vmatprep.subr.mxu0 0.0
    %1173 = vmatpush2.msra.mxu0 0.0
    %1174 = vmatprep.subr.mxu0 0.0
    %1175 = vmatpush2.msra.mxu0 0.0
    %1176 = vmatprep.subr.mxu0 0.0
    %1177 = vmatpush2.msra.mxu0 0.0
    %1178 = vmatprep.subr.mxu0 0.0
    %1179 = vmatpush2.msra.mxu0 0.0
    %1180 = vmatprep.subr.mxu0 0.0
    %1181 = vmatpush2.msra.mxu0 0.0
    %1182 = vmatprep.mubr.f32.mxu0 0.0
    %v1183 = vand.u32 %v137, 4294901760
    %1184 = vmatmul.mubr.f32.gmra.mxu0 %v1183
    %v1185 = vpop.f32.mrf.mxu0
    %v1186 = vadd.f32 %v1024, %v1185
    %v1187 = vpop.f32.mrf.mxu0
    %1188 = vmatprep.mubr.f32.mxu0 0.0
    %v1189 = vand.u32 %v140, 4294901760
    %1190 = vmatmul.mubr.f32.gmra.mxu0 %v1189
    %v1191 = vpop.f32.mrf.mxu0
    %v1192 = vadd.f32 %v1030, %v1191
    %v1193 = vpop.f32.mrf.mxu0
    %1194 = vmatprep.mubr.f32.mxu0 0.0
    %v1195 = vand.u32 %v143, 4294901760
    %1196 = vmatmul.mubr.f32.gmra.mxu0 %v1195
    %v1197 = vpop.f32.mrf.mxu0
    %v1198 = vadd.f32 %v1036, %v1197
    %v1199 = vpop.f32.mrf.mxu0
    %1200 = vmatprep.mubr.f32.mxu0 0.0
    %v1201 = vand.u32 %v146, 4294901760
    %1202 = vmatmul.mubr.f32.gmra.mxu0 %v1201
    %v1203 = vpop.f32.mrf.mxu0
    %v1204 = vadd.f32 %v1042, %v1203
    %v1205 = vpop.f32.mrf.mxu0
    %1206 = vmatprep.mubr.f32.mxu0 0.0
    %v1207 = vand.u32 %v149, 4294901760
    %1208 = vmatmul.mubr.f32.gmra.mxu0 %v1207
    %v1209 = vpop.f32.mrf.mxu0
    %v1210 = vadd.f32 %v1048, %v1209
    %v1211 = vpop.f32.mrf.mxu0
    %1212 = vmatprep.mubr.f32.mxu0 0.0
    %v1213 = vand.u32 %v152, 4294901760
    %1214 = vmatmul.mubr.f32.gmra.mxu0 %v1213
    %v1215 = vpop.f32.mrf.mxu0
    %v1216 = vadd.f32 %v1054, %v1215
    %v1217 = vpop.f32.mrf.mxu0
    %1218 = vmatprep.mubr.f32.mxu0 0.0
    %v1219 = vand.u32 %v155, 4294901760
    %1220 = vmatmul.mubr.f32.gmra.mxu0 %v1219
    %v1221 = vpop.f32.mrf.mxu0
    %v1222 = vadd.f32 %v1060, %v1221
    %v1223 = vpop.f32.mrf.mxu0
    %1224 = vmatprep.mubr.f32.mxu0 0.0
    %v1225 = vand.u32 %v158, 4294901760
    %1226 = vmatmul.mubr.f32.gmra.mxu0 %v1225
    %v1227 = vpop.f32.mrf.mxu0
    %v1228 = vadd.f32 %v1066, %v1227
    %v1229 = vpop.f32.mrf.mxu0
    %1230 = vmatprep.mubr.f32.mxu0 0.0
    %v1231 = vand.u32 %v161, 4294901760
    %1232 = vmatmul.mubr.f32.gmra.mxu0 %v1231
    %v1233 = vpop.f32.mrf.mxu0
    %v1234 = vadd.f32 %v1072, %v1233
    %v1235 = vpop.f32.mrf.mxu0
    %1236 = vmatprep.mubr.f32.mxu0 0.0
    %v1237 = vand.u32 %v164, 4294901760
    %1238 = vmatmul.mubr.f32.gmra.mxu0 %v1237
    %v1239 = vpop.f32.mrf.mxu0
    %v1240 = vadd.f32 %v1078, %v1239
    %v1241 = vpop.f32.mrf.mxu0
    %1242 = vmatprep.mubr.f32.mxu0 0.0
    %v1243 = vand.u32 %v167, 4294901760
    %1244 = vmatmul.mubr.f32.gmra.mxu0 %v1243
    %v1245 = vpop.f32.mrf.mxu0
    %v1246 = vadd.f32 %v1084, %v1245
    %v1247 = vpop.f32.mrf.mxu0
    %1248 = vmatprep.mubr.f32.mxu0 0.0
    %v1249 = vand.u32 %v170, 4294901760
    %1250 = vmatmul.mubr.f32.gmra.mxu0 %v1249
    %v1251 = vpop.f32.mrf.mxu0
    %v1252 = vadd.f32 %v1090, %v1251
    %v1253 = vpop.f32.mrf.mxu0
    %1254 = vmatprep.mubr.f32.mxu0 0.0
    %v1255 = vand.u32 %v173, 4294901760
    %1256 = vmatmul.mubr.f32.gmra.mxu0 %v1255
    %v1257 = vpop.f32.mrf.mxu0
    %v1258 = vadd.f32 %v1096, %v1257
    %v1259 = vpop.f32.mrf.mxu0
    %1260 = vmatprep.mubr.f32.mxu0 0.0
    %v1261 = vand.u32 %v176, 4294901760
    %1262 = vmatmul.mubr.f32.gmra.mxu0 %v1261
    %v1263 = vpop.f32.mrf.mxu0
    %v1264 = vadd.f32 %v1102, %v1263
    %v1265 = vpop.f32.mrf.mxu0
    %1266 = vmatprep.mubr.f32.mxu0 0.0
    %v1267 = vand.u32 %v179, 4294901760
    %1268 = vmatmul.mubr.f32.gmra.mxu0 %v1267
    %v1269 = vpop.f32.mrf.mxu0
    %v1270 = vadd.f32 %v1108, %v1269
    %v1271 = vpop.f32.mrf.mxu0
    %1272 = vmatprep.mubr.f32.mxu0 0.0
    %v1273 = vand.u32 %v182, 4294901760
    %1274 = vmatmul.mubr.f32.gmra.mxu0 %v1273
    %v1275 = vpop.f32.mrf.mxu0
    %v1276 = vadd.f32 %v1114, %v1275
    %v1277 = vpop.f32.mrf.mxu0
    %1278 = vdwg.mxu0
    %v1279 = vmax.f32 %v1186, 0.0
    %v1280 = vmax.f32 %v1192, 0.0
    %v1281 = vmax.f32 %v1198, 0.0
    %v1282 = vmax.f32 %v1204, 0.0
    %v1283 = vmax.f32 %v1210, 0.0
    %v1284 = vmax.f32 %v1216, 0.0
    %v1285 = vmax.f32 %v1222, 0.0
    %v1286 = vmax.f32 %v1228, 0.0
    %v1287 = vmax.f32 %v1234, 0.0
    %v1288 = vmax.f32 %v1240, 0.0
    %v1289 = vmax.f32 %v1246, 0.0
    %v1290 = vmax.f32 %v1252, 0.0
    %v1291 = vmax.f32 %v1258, 0.0
    %v1292 = vmax.f32 %v1264, 0.0
    %v1293 = vmax.f32 %v1270, 0.0
    %v1294 = vmax.f32 %v1276, 0.0
    %v1295 = vld [vmem:[%s3] sm:$0x1]
    %s1296 = sld [smem:[#allocation2]]
    %v1297 = vstv %s1296
    %1298 = vmatprep.subr.mxu0 0.0
    %v1299 = vand.u32 %v1294, 4294901760
    %1300 = vmatpush1.msra.mxu0 %v1299
    %1301 = vmatprep.subr.mxu0 0.0
    %v1302 = vand.u32 %v1293, 4294901760
    %1303 = vmatpush1.msra.mxu0 %v1302
    %1304 = vmatprep.subr.mxu0 0.0
    %v1305 = vand.u32 %v1292, 4294901760
    %1306 = vmatpush1.msra.mxu0 %v1305
    %1307 = vmatprep.subr.mxu0 0.0
    %v1308 = vand.u32 %v1291, 4294901760
    %1309 = vmatpush1.msra.mxu0 %v1308
    %1310 = vmatprep.subr.mxu0 0.0
    %v1311 = vand.u32 %v1290, 4294901760
    %1312 = vmatpush1.msra.mxu0 %v1311
    %1313 = vmatprep.subr.mxu0 0.0
    %v1314 = vand.u32 %v1289, 4294901760
    %1315 = vmatpush1.msra.mxu0 %v1314
    %1316 = vmatprep.subr.mxu0 0.0
    %v1317 = vand.u32 %v1288, 4294901760
    %1318 = vmatpush1.msra.mxu0 %v1317
    %1319 = vmatprep.subr.mxu0 0.0
    %v1320 = vand.u32 %v1287, 4294901760
    %1321 = vmatpush1.msra.mxu0 %v1320
    %1322 = vmatprep.subr.mxu0 0.0
    %v1323 = vand.u32 %v1286, 4294901760
    %1324 = vmatpush1.msra.mxu0 %v1323
    %1325 = vmatprep.subr.mxu0 0.0
    %v1326 = vand.u32 %v1285, 4294901760
    %1327 = vmatpush1.msra.mxu0 %v1326
    %1328 = vmatprep.subr.mxu0 0.0
    %v1329 = vand.u32 %v1284, 4294901760
    %1330 = vmatpush1.msra.mxu0 %v1329
    %1331 = vmatprep.subr.mxu0 0.0
    %v1332 = vand.u32 %v1283, 4294901760
    %1333 = vmatpush1.msra.mxu0 %v1332
    %1334 = vmatprep.subr.mxu0 0.0
    %v1335 = vand.u32 %v1282, 4294901760
    %1336 = vmatpush1.msra.mxu0 %v1335
    %1337 = vmatprep.subr.mxu0 0.0
    %v1338 = vand.u32 %v1281, 4294901760
    %1339 = vmatpush1.msra.mxu0 %v1338
    %1340 = vmatprep.subr.mxu0 0.0
    %v1341 = vand.u32 %v1280, 4294901760
    %1342 = vmatpush1.msra.mxu0 %v1341
    %1343 = vmatprep.subr.mxu0 0.0
    %v1344 = vand.u32 %v1279, 4294901760
    %1345 = vmatpush1.msra.mxu0 %v1344
    %1346 = vmatprep.subr.mxu0 0.0
    %1347 = vmatpush2.msra.mxu0 0.0
    %1348 = vmatprep.subr.mxu0 0.0
    %1349 = vmatpush2.msra.mxu0 0.0
    %1350 = vmatprep.subr.mxu0 0.0
    %1351 = vmatpush2.msra.mxu0 0.0
    %1352 = vmatprep.subr.mxu0 0.0
    %1353 = vmatpush2.msra.mxu0 0.0
    %1354 = vmatprep.subr.mxu0 0.0
    %1355 = vmatpush2.msra.mxu0 0.0
    %1356 = vmatprep.subr.mxu0 0.0
    %1357 = vmatpush2.msra.mxu0 0.0
    %1358 = vmatprep.subr.mxu0 0.0
    %1359 = vmatpush2.msra.mxu0 0.0
    %1360 = vmatprep.subr.mxu0 0.0
    %1361 = vmatpush2.msra.mxu0 0.0
    %1362 = vmatprep.subr.mxu0 0.0
    %1363 = vmatpush2.msra.mxu0 0.0
    %1364 = vmatprep.subr.mxu0 0.0
    %1365 = vmatpush2.msra.mxu0 0.0
    %1366 = vmatprep.subr.mxu0 0.0
    %1367 = vmatpush2.msra.mxu0 0.0
    %1368 = vmatprep.subr.mxu0 0.0
    %1369 = vmatpush2.msra.mxu0 0.0
    %1370 = vmatprep.subr.mxu0 0.0
    %1371 = vmatpush2.msra.mxu0 0.0
    %1372 = vmatprep.subr.mxu0 0.0
    %1373 = vmatpush2.msra.mxu0 0.0
    %1374 = vmatprep.subr.mxu0 0.0
    %1375 = vmatpush2.msra.mxu0 0.0
    %1376 = vmatprep.subr.mxu0 0.0
    %1377 = vmatpush2.msra.mxu0 0.0
    %1378 = vmatprep.mubr.f32.mxu0 0.0
    %v1379 = vand.u32 %v1295, 4294901760
    %v1380 = vsub.f32 %v1295, %v1379
    %v1381 = vand.u32 %v1380, 4294901760
    %v1382 = vsub.f32 %v1380, %v1381
    %v1383 = vand.u32 %v1382, 4294901760
    %1384 = vmatmul.mubr.f32.gmra.mxu0 %v1383
    %v1385 = vpop.f32.mrf.mxu0
    %v1386 = vadd.f32 %v1297, %v1385
    %v1387 = vpop.f32.mrf.mxu0
    %1388 = vdwg.mxu0
    %1389 = vmatprep.subr.mxu0 0.0
    %v1390 = vand.u32 %v1294, 4294901760
    %v1391 = vsub.f32 %v1294, %v1390
    %v1392 = vand.u32 %v1391, 4294901760
    %v1393 = vsub.f32 %v1391, %v1392
    %v1394 = vand.u32 %v1393, 4294901760
    %1395 = vmatpush1.msra.mxu0 %v1394
    %1396 = vmatprep.subr.mxu0 0.0
    %v1397 = vand.u32 %v1293, 4294901760
    %v1398 = vsub.f32 %v1293, %v1397
    %v1399 = vand.u32 %v1398, 4294901760
    %v1400 = vsub.f32 %v1398, %v1399
    %v1401 = vand.u32 %v1400, 4294901760
    %1402 = vmatpush1.msra.mxu0 %v1401
    %1403 = vmatprep.subr.mxu0 0.0
    %v1404 = vand.u32 %v1292, 4294901760
    %v1405 = vsub.f32 %v1292, %v1404
    %v1406 = vand.u32 %v1405, 4294901760
    %v1407 = vsub.f32 %v1405, %v1406
    %v1408 = vand.u32 %v1407, 4294901760
    %1409 = vmatpush1.msra.mxu0 %v1408
    %1410 = vmatprep.subr.mxu0 0.0
    %v1411 = vand.u32 %v1291, 4294901760
    %v1412 = vsub.f32 %v1291, %v1411
    %v1413 = vand.u32 %v1412, 4294901760
    %v1414 = vsub.f32 %v1412, %v1413
    %v1415 = vand.u32 %v1414, 4294901760
    %1416 = vmatpush1.msra.mxu0 %v1415
    %1417 = vmatprep.subr.mxu0 0.0
    %v1418 = vand.u32 %v1290, 4294901760
    %v1419 = vsub.f32 %v1290, %v1418
    %v1420 = vand.u32 %v1419, 4294901760
    %v1421 = vsub.f32 %v1419, %v1420
    %v1422 = vand.u32 %v1421, 4294901760
    %1423 = vmatpush1.msra.mxu0 %v1422
    %1424 = vmatprep.subr.mxu0 0.0
    %v1425 = vand.u32 %v1289, 4294901760
    %v1426 = vsub.f32 %v1289, %v1425
    %v1427 = vand.u32 %v1426, 4294901760
    %v1428 = vsub.f32 %v1426, %v1427
    %v1429 = vand.u32 %v1428, 4294901760
    %1430 = vmatpush1.msra.mxu0 %v1429
    %1431 = vmatprep.subr.mxu0 0.0
    %v1432 = vand.u32 %v1288, 4294901760
    %v1433 = vsub.f32 %v1288, %v1432
    %v1434 = vand.u32 %v1433, 4294901760
    %v1435 = vsub.f32 %v1433, %v1434
    %v1436 = vand.u32 %v1435, 4294901760
    %1437 = vmatpush1.msra.mxu0 %v1436
    %1438 = vmatprep.subr.mxu0 0.0
    %v1439 = vand.u32 %v1287, 4294901760
    %v1440 = vsub.f32 %v1287, %v1439
    %v1441 = vand.u32 %v1440, 4294901760
    %v1442 = vsub.f32 %v1440, %v1441
    %v1443 = vand.u32 %v1442, 4294901760
    %1444 = vmatpush1.msra.mxu0 %v1443
    %1445 = vmatprep.subr.mxu0 0.0
    %v1446 = vand.u32 %v1286, 4294901760
    %v1447 = vsub.f32 %v1286, %v1446
    %v1448 = vand.u32 %v1447, 4294901760
    %v1449 = vsub.f32 %v1447, %v1448
    %v1450 = vand.u32 %v1449, 4294901760
    %1451 = vmatpush1.msra.mxu0 %v1450
    %1452 = vmatprep.subr.mxu0 0.0
    %v1453 = vand.u32 %v1285, 4294901760
    %v1454 = vsub.f32 %v1285, %v1453
    %v1455 = vand.u32 %v1454, 4294901760
    %v1456 = vsub.f32 %v1454, %v1455
    %v1457 = vand.u32 %v1456, 4294901760
    %1458 = vmatpush1.msra.mxu0 %v1457
    %1459 = vmatprep.subr.mxu0 0.0
    %v1460 = vand.u32 %v1284, 4294901760
    %v1461 = vsub.f32 %v1284, %v1460
    %v1462 = vand.u32 %v1461, 4294901760
    %v1463 = vsub.f32 %v1461, %v1462
    %v1464 = vand.u32 %v1463, 4294901760
    %1465 = vmatpush1.msra.mxu0 %v1464
    %1466 = vmatprep.subr.mxu0 0.0
    %v1467 = vand.u32 %v1283, 4294901760
    %v1468 = vsub.f32 %v1283, %v1467
    %v1469 = vand.u32 %v1468, 4294901760
    %v1470 = vsub.f32 %v1468, %v1469
    %v1471 = vand.u32 %v1470, 4294901760
    %1472 = vmatpush1.msra.mxu0 %v1471
    %1473 = vmatprep.subr.mxu0 0.0
    %v1474 = vand.u32 %v1282, 4294901760
    %v1475 = vsub.f32 %v1282, %v1474
    %v1476 = vand.u32 %v1475, 4294901760
    %v1477 = vsub.f32 %v1475, %v1476
    %v1478 = vand.u32 %v1477, 4294901760
    %1479 = vmatpush1.msra.mxu0 %v1478
    %1480 = vmatprep.subr.mxu0 0.0
    %v1481 = vand.u32 %v1281, 4294901760
    %v1482 = vsub.f32 %v1281, %v1481
    %v1483 = vand.u32 %v1482, 4294901760
    %v1484 = vsub.f32 %v1482, %v1483
    %v1485 = vand.u32 %v1484, 4294901760
    %1486 = vmatpush1.msra.mxu0 %v1485
    %1487 = vmatprep.subr.mxu0 0.0
    %v1488 = vand.u32 %v1280, 4294901760
    %v1489 = vsub.f32 %v1280, %v1488
    %v1490 = vand.u32 %v1489, 4294901760
    %v1491 = vsub.f32 %v1489, %v1490
    %v1492 = vand.u32 %v1491, 4294901760
    %1493 = vmatpush1.msra.mxu0 %v1492
    %1494 = vmatprep.subr.mxu0 0.0
    %v1495 = vand.u32 %v1279, 4294901760
    %v1496 = vsub.f32 %v1279, %v1495
    %v1497 = vand.u32 %v1496, 4294901760
    %v1498 = vsub.f32 %v1496, %v1497
    %v1499 = vand.u32 %v1498, 4294901760
    %1500 = vmatpush1.msra.mxu0 %v1499
    %1501 = vmatprep.subr.mxu0 0.0
    %1502 = vmatpush2.msra.mxu0 0.0
    %1503 = vmatprep.subr.mxu0 0.0
    %1504 = vmatpush2.msra.mxu0 0.0
    %1505 = vmatprep.subr.mxu0 0.0
    %1506 = vmatpush2.msra.mxu0 0.0
    %1507 = vmatprep.subr.mxu0 0.0
    %1508 = vmatpush2.msra.mxu0 0.0
    %1509 = vmatprep.subr.mxu0 0.0
    %1510 = vmatpush2.msra.mxu0 0.0
    %1511 = vmatprep.subr.mxu0 0.0
    %1512 = vmatpush2.msra.mxu0 0.0
    %1513 = vmatprep.subr.mxu0 0.0
    %1514 = vmatpush2.msra.mxu0 0.0
    %1515 = vmatprep.subr.mxu0 0.0
    %1516 = vmatpush2.msra.mxu0 0.0
    %1517 = vmatprep.subr.mxu0 0.0
    %1518 = vmatpush2.msra.mxu0 0.0
    %1519 = vmatprep.subr.mxu0 0.0
    %1520 = vmatpush2.msra.mxu0 0.0
    %1521 = vmatprep.subr.mxu0 0.0
    %1522 = vmatpush2.msra.mxu0 0.0
    %1523 = vmatprep.subr.mxu0 0.0
    %1524 = vmatpush2.msra.mxu0 0.0
    %1525 = vmatprep.subr.mxu0 0.0
    %1526 = vmatpush2.msra.mxu0 0.0
    %1527 = vmatprep.subr.mxu0 0.0
    %1528 = vmatpush2.msra.mxu0 0.0
    %1529 = vmatprep.subr.mxu0 0.0
    %1530 = vmatpush2.msra.mxu0 0.0
    %1531 = vmatprep.subr.mxu0 0.0
    %1532 = vmatpush2.msra.mxu0 0.0
    %1533 = vmatprep.mubr.f32.mxu0 0.0
    %v1534 = vand.u32 %v1295, 4294901760
    %1535 = vmatmul.mubr.f32.gmra.mxu0 %v1534
    %v1536 = vpop.f32.mrf.mxu0
    %v1537 = vadd.f32 %v1386, %v1536
    %v1538 = vpop.f32.mrf.mxu0
    %1539 = vdwg.mxu0
    %1540 = vmatprep.subr.mxu0 0.0
    %v1541 = vand.u32 %v1294, 4294901760
    %v1542 = vsub.f32 %v1294, %v1541
    %1543 = vmatpush1.msra.mxu0 %v1542
    %1544 = vmatprep.subr.mxu0 0.0
    %v1545 = vand.u32 %v1293, 4294901760
    %v1546 = vsub.f32 %v1293, %v1545
    %1547 = vmatpush1.msra.mxu0 %v1546
    %1548 = vmatprep.subr.mxu0 0.0
    %v1549 = vand.u32 %v1292, 4294901760
    %v1550 = vsub.f32 %v1292, %v1549
    %1551 = vmatpush1.msra.mxu0 %v1550
    %1552 = vmatprep.subr.mxu0 0.0
    %v1553 = vand.u32 %v1291, 4294901760
    %v1554 = vsub.f32 %v1291, %v1553
    %1555 = vmatpush1.msra.mxu0 %v1554
    %1556 = vmatprep.subr.mxu0 0.0
    %v1557 = vand.u32 %v1290, 4294901760
    %v1558 = vsub.f32 %v1290, %v1557
    %1559 = vmatpush1.msra.mxu0 %v1558
    %1560 = vmatprep.subr.mxu0 0.0
    %v1561 = vand.u32 %v1289, 4294901760
    %v1562 = vsub.f32 %v1289, %v1561
    %1563 = vmatpush1.msra.mxu0 %v1562
    %1564 = vmatprep.subr.mxu0 0.0
    %v1565 = vand.u32 %v1288, 4294901760
    %v1566 = vsub.f32 %v1288, %v1565
    %1567 = vmatpush1.msra.mxu0 %v1566
    %1568 = vmatprep.subr.mxu0 0.0
    %v1569 = vand.u32 %v1287, 4294901760
    %v1570 = vsub.f32 %v1287, %v1569
    %1571 = vmatpush1.msra.mxu0 %v1570
    %1572 = vmatprep.subr.mxu0 0.0
    %v1573 = vand.u32 %v1286, 4294901760
    %v1574 = vsub.f32 %v1286, %v1573
    %1575 = vmatpush1.msra.mxu0 %v1574
    %1576 = vmatprep.subr.mxu0 0.0
    %v1577 = vand.u32 %v1285, 4294901760
    %v1578 = vsub.f32 %v1285, %v1577
    %1579 = vmatpush1.msra.mxu0 %v1578
    %1580 = vmatprep.subr.mxu0 0.0
    %v1581 = vand.u32 %v1284, 4294901760
    %v1582 = vsub.f32 %v1284, %v1581
    %1583 = vmatpush1.msra.mxu0 %v1582
    %1584 = vmatprep.subr.mxu0 0.0
    %v1585 = vand.u32 %v1283, 4294901760
    %v1586 = vsub.f32 %v1283, %v1585
    %1587 = vmatpush1.msra.mxu0 %v1586
    %1588 = vmatprep.subr.mxu0 0.0
    %v1589 = vand.u32 %v1282, 4294901760
    %v1590 = vsub.f32 %v1282, %v1589
    %1591 = vmatpush1.msra.mxu0 %v1590
    %1592 = vmatprep.subr.mxu0 0.0
    %v1593 = vand.u32 %v1281, 4294901760
    %v1594 = vsub.f32 %v1281, %v1593
    %1595 = vmatpush1.msra.mxu0 %v1594
    %1596 = vmatprep.subr.mxu0 0.0
    %v1597 = vand.u32 %v1280, 4294901760
    %v1598 = vsub.f32 %v1280, %v1597
    %1599 = vmatpush1.msra.mxu0 %v1598
    %1600 = vmatprep.subr.mxu0 0.0
    %v1601 = vand.u32 %v1279, 4294901760
    %v1602 = vsub.f32 %v1279, %v1601
    %1603 = vmatpush1.msra.mxu0 %v1602
    %1604 = vmatprep.subr.mxu0 0.0
    %1605 = vmatpush2.msra.mxu0 0.0
    %1606 = vmatprep.subr.mxu0 0.0
    %1607 = vmatpush2.msra.mxu0 0.0
    %1608 = vmatprep.subr.mxu0 0.0
    %1609 = vmatpush2.msra.mxu0 0.0
    %1610 = vmatprep.subr.mxu0 0.0
    %1611 = vmatpush2.msra.mxu0 0.0
    %1612 = vmatprep.subr.mxu0 0.0
    %1613 = vmatpush2.msra.mxu0 0.0
    %1614 = vmatprep.subr.mxu0 0.0
    %1615 = vmatpush2.msra.mxu0 0.0
    %1616 = vmatprep.subr.mxu0 0.0
    %1617 = vmatpush2.msra.mxu0 0.0
    %1618 = vmatprep.subr.mxu0 0.0
    %1619 = vmatpush2.msra.mxu0 0.0
    %1620 = vmatprep.subr.mxu0 0.0
    %1621 = vmatpush2.msra.mxu0 0.0
    %1622 = vmatprep.subr.mxu0 0.0
    %1623 = vmatpush2.msra.mxu0 0.0
    %1624 = vmatprep.subr.mxu0 0.0
    %1625 = vmatpush2.msra.mxu0 0.0
    %1626 = vmatprep.subr.mxu0 0.0
    %1627 = vmatpush2.msra.mxu0 0.0
    %1628 = vmatprep.subr.mxu0 0.0
    %1629 = vmatpush2.msra.mxu0 0.0
    %1630 = vmatprep.subr.mxu0 0.0
    %1631 = vmatpush2.msra.mxu0 0.0
    %1632 = vmatprep.subr.mxu0 0.0
    %1633 = vmatpush2.msra.mxu0 0.0
    %1634 = vmatprep.subr.mxu0 0.0
    %1635 = vmatpush2.msra.mxu0 0.0
    %1636 = vmatprep.mubr.f32.mxu0 0.0
    %v1637 = vand.u32 %v1295, 4294901760
    %v1638 = vsub.f32 %v1295, %v1637
    %1639 = vmatmul.mubr.f32.gmra.mxu0 %v1638
    %v1640 = vpop.f32.mrf.mxu0
    %v1641 = vadd.f32 %v1537, %v1640
    %v1642 = vpop.f32.mrf.mxu0
    %1643 = vdwg.mxu0
    %1644 = vmatprep.subr.mxu0 0.0
    %v1645 = vand.u32 %v1294, 4294901760
    %1646 = vmatpush1.msra.mxu0 %v1645
    %1647 = vmatprep.subr.mxu0 0.0
    %v1648 = vand.u32 %v1293, 4294901760
    %1649 = vmatpush1.msra.mxu0 %v1648
    %1650 = vmatprep.subr.mxu0 0.0
    %v1651 = vand.u32 %v1292, 4294901760
    %1652 = vmatpush1.msra.mxu0 %v1651
    %1653 = vmatprep.subr.mxu0 0.0
    %v1654 = vand.u32 %v1291, 4294901760
    %1655 = vmatpush1.msra.mxu0 %v1654
    %1656 = vmatprep.subr.mxu0 0.0
    %v1657 = vand.u32 %v1290, 4294901760
    %1658 = vmatpush1.msra.mxu0 %v1657
    %1659 = vmatprep.subr.mxu0 0.0
    %v1660 = vand.u32 %v1289, 4294901760
    %1661 = vmatpush1.msra.mxu0 %v1660
    %1662 = vmatprep.subr.mxu0 0.0
    %v1663 = vand.u32 %v1288, 4294901760
    %1664 = vmatpush1.msra.mxu0 %v1663
    %1665 = vmatprep.subr.mxu0 0.0
    %v1666 = vand.u32 %v1287, 4294901760
    %1667 = vmatpush1.msra.mxu0 %v1666
    %1668 = vmatprep.subr.mxu0 0.0
    %v1669 = vand.u32 %v1286, 4294901760
    %1670 = vmatpush1.msra.mxu0 %v1669
    %1671 = vmatprep.subr.mxu0 0.0
    %v1672 = vand.u32 %v1285, 4294901760
    %1673 = vmatpush1.msra.mxu0 %v1672
    %1674 = vmatprep.subr.mxu0 0.0
    %v1675 = vand.u32 %v1284, 4294901760
    %1676 = vmatpush1.msra.mxu0 %v1675
    %1677 = vmatprep.subr.mxu0 0.0
    %v1678 = vand.u32 %v1283, 4294901760
    %1679 = vmatpush1.msra.mxu0 %v1678
    %1680 = vmatprep.subr.mxu0 0.0
    %v1681 = vand.u32 %v1282, 4294901760
    %1682 = vmatpush1.msra.mxu0 %v1681
    %1683 = vmatprep.subr.mxu0 0.0
    %v1684 = vand.u32 %v1281, 4294901760
    %1685 = vmatpush1.msra.mxu0 %v1684
    %1686 = vmatprep.subr.mxu0 0.0
    %v1687 = vand.u32 %v1280, 4294901760
    %1688 = vmatpush1.msra.mxu0 %v1687
    %1689 = vmatprep.subr.mxu0 0.0
    %v1690 = vand.u32 %v1279, 4294901760
    %1691 = vmatpush1.msra.mxu0 %v1690
    %1692 = vmatprep.subr.mxu0 0.0
    %1693 = vmatpush2.msra.mxu0 0.0
    %1694 = vmatprep.subr.mxu0 0.0
    %1695 = vmatpush2.msra.mxu0 0.0
    %1696 = vmatprep.subr.mxu0 0.0
    %1697 = vmatpush2.msra.mxu0 0.0
    %1698 = vmatprep.subr.mxu0 0.0
    %1699 = vmatpush2.msra.mxu0 0.0
    %1700 = vmatprep.subr.mxu0 0.0
    %1701 = vmatpush2.msra.mxu0 0.0
    %1702 = vmatprep.subr.mxu0 0.0
    %1703 = vmatpush2.msra.mxu0 0.0
    %1704 = vmatprep.subr.mxu0 0.0
    %1705 = vmatpush2.msra.mxu0 0.0
    %1706 = vmatprep.subr.mxu0 0.0
    %1707 = vmatpush2.msra.mxu0 0.0
    %1708 = vmatprep.subr.mxu0 0.0
    %1709 = vmatpush2.msra.mxu0 0.0
    %1710 = vmatprep.subr.mxu0 0.0
    %1711 = vmatpush2.msra.mxu0 0.0
    %1712 = vmatprep.subr.mxu0 0.0
    %1713 = vmatpush2.msra.mxu0 0.0
    %1714 = vmatprep.subr.mxu0 0.0
    %1715 = vmatpush2.msra.mxu0 0.0
    %1716 = vmatprep.subr.mxu0 0.0
    %1717 = vmatpush2.msra.mxu0 0.0
    %1718 = vmatprep.subr.mxu0 0.0
    %1719 = vmatpush2.msra.mxu0 0.0
    %1720 = vmatprep.subr.mxu0 0.0
    %1721 = vmatpush2.msra.mxu0 0.0
    %1722 = vmatprep.subr.mxu0 0.0
    %1723 = vmatpush2.msra.mxu0 0.0
    %1724 = vmatprep.mubr.f32.mxu0 0.0
    %v1725 = vand.u32 %v1295, 4294901760
    %v1726 = vsub.f32 %v1295, %v1725
    %v1727 = vand.u32 %v1726, 4294901760
    %1728 = vmatmul.mubr.f32.gmra.mxu0 %v1727
    %v1729 = vpop.f32.mrf.mxu0
    %v1730 = vadd.f32 %v1641, %v1729
    %v1731 = vpop.f32.mrf.mxu0
    %1732 = vdwg.mxu0
    %1733 = vmatprep.subr.mxu0 0.0
    %v1734 = vand.u32 %v1294, 4294901760
    %v1735 = vsub.f32 %v1294, %v1734
    %v1736 = vand.u32 %v1735, 4294901760
    %1737 = vmatpush1.msra.mxu0 %v1736
    %1738 = vmatprep.subr.mxu0 0.0
    %v1739 = vand.u32 %v1293, 4294901760
    %v1740 = vsub.f32 %v1293, %v1739
    %v1741 = vand.u32 %v1740, 4294901760
    %1742 = vmatpush1.msra.mxu0 %v1741
    %1743 = vmatprep.subr.mxu0 0.0
    %v1744 = vand.u32 %v1292, 4294901760
    %v1745 = vsub.f32 %v1292, %v1744
    %v1746 = vand.u32 %v1745, 4294901760
    %1747 = vmatpush1.msra.mxu0 %v1746
    %1748 = vmatprep.subr.mxu0 0.0
    %v1749 = vand.u32 %v1291, 4294901760
    %v1750 = vsub.f32 %v1291, %v1749
    %v1751 = vand.u32 %v1750, 4294901760
    %1752 = vmatpush1.msra.mxu0 %v1751
    %1753 = vmatprep.subr.mxu0 0.0
    %v1754 = vand.u32 %v1290, 4294901760
    %v1755 = vsub.f32 %v1290, %v1754
    %v1756 = vand.u32 %v1755, 4294901760
    %1757 = vmatpush1.msra.mxu0 %v1756
    %1758 = vmatprep.subr.mxu0 0.0
    %v1759 = vand.u32 %v1289, 4294901760
    %v1760 = vsub.f32 %v1289, %v1759
    %v1761 = vand.u32 %v1760, 4294901760
    %1762 = vmatpush1.msra.mxu0 %v1761
    %1763 = vmatprep.subr.mxu0 0.0
    %v1764 = vand.u32 %v1288, 4294901760
    %v1765 = vsub.f32 %v1288, %v1764
    %v1766 = vand.u32 %v1765, 4294901760
    %1767 = vmatpush1.msra.mxu0 %v1766
    %1768 = vmatprep.subr.mxu0 0.0
    %v1769 = vand.u32 %v1287, 4294901760
    %v1770 = vsub.f32 %v1287, %v1769
    %v1771 = vand.u32 %v1770, 4294901760
    %1772 = vmatpush1.msra.mxu0 %v1771
    %1773 = vmatprep.subr.mxu0 0.0
    %v1774 = vand.u32 %v1286, 4294901760
    %v1775 = vsub.f32 %v1286, %v1774
    %v1776 = vand.u32 %v1775, 4294901760
    %1777 = vmatpush1.msra.mxu0 %v1776
    %1778 = vmatprep.subr.mxu0 0.0
    %v1779 = vand.u32 %v1285, 4294901760
    %v1780 = vsub.f32 %v1285, %v1779
    %v1781 = vand.u32 %v1780, 4294901760
    %1782 = vmatpush1.msra.mxu0 %v1781
    %1783 = vmatprep.subr.mxu0 0.0
    %v1784 = vand.u32 %v1284, 4294901760
    %v1785 = vsub.f32 %v1284, %v1784
    %v1786 = vand.u32 %v1785, 4294901760
    %1787 = vmatpush1.msra.mxu0 %v1786
    %1788 = vmatprep.subr.mxu0 0.0
    %v1789 = vand.u32 %v1283, 4294901760
    %v1790 = vsub.f32 %v1283, %v1789
    %v1791 = vand.u32 %v1790, 4294901760
    %1792 = vmatpush1.msra.mxu0 %v1791
    %1793 = vmatprep.subr.mxu0 0.0
    %v1794 = vand.u32 %v1282, 4294901760
    %v1795 = vsub.f32 %v1282, %v1794
    %v1796 = vand.u32 %v1795, 4294901760
    %1797 = vmatpush1.msra.mxu0 %v1796
    %1798 = vmatprep.subr.mxu0 0.0
    %v1799 = vand.u32 %v1281, 4294901760
    %v1800 = vsub.f32 %v1281, %v1799
    %v1801 = vand.u32 %v1800, 4294901760
    %1802 = vmatpush1.msra.mxu0 %v1801
    %1803 = vmatprep.subr.mxu0 0.0
    %v1804 = vand.u32 %v1280, 4294901760
    %v1805 = vsub.f32 %v1280, %v1804
    %v1806 = vand.u32 %v1805, 4294901760
    %1807 = vmatpush1.msra.mxu0 %v1806
    %1808 = vmatprep.subr.mxu0 0.0
    %v1809 = vand.u32 %v1279, 4294901760
    %v1810 = vsub.f32 %v1279, %v1809
    %v1811 = vand.u32 %v1810, 4294901760
    %1812 = vmatpush1.msra.mxu0 %v1811
    %1813 = vmatprep.subr.mxu0 0.0
    %1814 = vmatpush2.msra.mxu0 0.0
    %1815 = vmatprep.subr.mxu0 0.0
    %1816 = vmatpush2.msra.mxu0 0.0
    %1817 = vmatprep.subr.mxu0 0.0
    %1818 = vmatpush2.msra.mxu0 0.0
    %1819 = vmatprep.subr.mxu0 0.0
    %1820 = vmatpush2.msra.mxu0 0.0
    %1821 = vmatprep.subr.mxu0 0.0
    %1822 = vmatpush2.msra.mxu0 0.0
    %1823 = vmatprep.subr.mxu0 0.0
    %1824 = vmatpush2.msra.mxu0 0.0
    %1825 = vmatprep.subr.mxu0 0.0
    %1826 = vmatpush2.msra.mxu0 0.0
    %1827 = vmatprep.subr.mxu0 0.0
    %1828 = vmatpush2.msra.mxu0 0.0
    %1829 = vmatprep.subr.mxu0 0.0
    %1830 = vmatpush2.msra.mxu0 0.0
    %1831 = vmatprep.subr.mxu0 0.0
    %1832 = vmatpush2.msra.mxu0 0.0
    %1833 = vmatprep.subr.mxu0 0.0
    %1834 = vmatpush2.msra.mxu0 0.0
    %1835 = vmatprep.subr.mxu0 0.0
    %1836 = vmatpush2.msra.mxu0 0.0
    %1837 = vmatprep.subr.mxu0 0.0
    %1838 = vmatpush2.msra.mxu0 0.0
    %1839 = vmatprep.subr.mxu0 0.0
    %1840 = vmatpush2.msra.mxu0 0.0
    %1841 = vmatprep.subr.mxu0 0.0
    %1842 = vmatpush2.msra.mxu0 0.0
    %1843 = vmatprep.subr.mxu0 0.0
    %1844 = vmatpush2.msra.mxu0 0.0
    %1845 = vmatprep.mubr.f32.mxu0 0.0
    %v1846 = vand.u32 %v1295, 4294901760
    %1847 = vmatmul.mubr.f32.gmra.mxu0 %v1846
    %v1848 = vpop.f32.mrf.mxu0
    %v1849 = vadd.f32 %v1730, %v1848
    %v1850 = vpop.f32.mrf.mxu0
    %1851 = vdwg.mxu0
    %1852 = vmatprep.subr.mxu0 0.0
    %v1853 = vand.u32 %v1294, 4294901760
    %1854 = vmatpush1.msra.mxu0 %v1853
    %1855 = vmatprep.subr.mxu0 0.0
    %v1856 = vand.u32 %v1293, 4294901760
    %1857 = vmatpush1.msra.mxu0 %v1856
    %1858 = vmatprep.subr.mxu0 0.0
    %v1859 = vand.u32 %v1292, 4294901760
    %1860 = vmatpush1.msra.mxu0 %v1859
    %1861 = vmatprep.subr.mxu0 0.0
    %v1862 = vand.u32 %v1291, 4294901760
    %1863 = vmatpush1.msra.mxu0 %v1862
    %1864 = vmatprep.subr.mxu0 0.0
    %v1865 = vand.u32 %v1290, 4294901760
    %1866 = vmatpush1.msra.mxu0 %v1865
    %1867 = vmatprep.subr.mxu0 0.0
    %v1868 = vand.u32 %v1289, 4294901760
    %1869 = vmatpush1.msra.mxu0 %v1868
    %1870 = vmatprep.subr.mxu0 0.0
    %v1871 = vand.u32 %v1288, 4294901760
    %1872 = vmatpush1.msra.mxu0 %v1871
    %1873 = vmatprep.subr.mxu0 0.0
    %v1874 = vand.u32 %v1287, 4294901760
    %1875 = vmatpush1.msra.mxu0 %v1874
    %1876 = vmatprep.subr.mxu0 0.0
    %v1877 = vand.u32 %v1286, 4294901760
    %1878 = vmatpush1.msra.mxu0 %v1877
    %1879 = vmatprep.subr.mxu0 0.0
    %v1880 = vand.u32 %v1285, 4294901760
    %1881 = vmatpush1.msra.mxu0 %v1880
    %1882 = vmatprep.subr.mxu0 0.0
    %v1883 = vand.u32 %v1284, 4294901760
    %1884 = vmatpush1.msra.mxu0 %v1883
    %1885 = vmatprep.subr.mxu0 0.0
    %v1886 = vand.u32 %v1283, 4294901760
    %1887 = vmatpush1.msra.mxu0 %v1886
    %1888 = vmatprep.subr.mxu0 0.0
    %v1889 = vand.u32 %v1282, 4294901760
    %1890 = vmatpush1.msra.mxu0 %v1889
    %1891 = vmatprep.subr.mxu0 0.0
    %v1892 = vand.u32 %v1281, 4294901760
    %1893 = vmatpush1.msra.mxu0 %v1892
    %1894 = vmatprep.subr.mxu0 0.0
    %v1895 = vand.u32 %v1280, 4294901760
    %1896 = vmatpush1.msra.mxu0 %v1895
    %1897 = vmatprep.subr.mxu0 0.0
    %v1898 = vand.u32 %v1279, 4294901760
    %1899 = vmatpush1.msra.mxu0 %v1898
    %1900 = vmatprep.subr.mxu0 0.0
    %1901 = vmatpush2.msra.mxu0 0.0
    %1902 = vmatprep.subr.mxu0 0.0
    %1903 = vmatpush2.msra.mxu0 0.0
    %1904 = vmatprep.subr.mxu0 0.0
    %1905 = vmatpush2.msra.mxu0 0.0
    %1906 = vmatprep.subr.mxu0 0.0
    %1907 = vmatpush2.msra.mxu0 0.0
    %1908 = vmatprep.subr.mxu0 0.0
    %1909 = vmatpush2.msra.mxu0 0.0
    %1910 = vmatprep.subr.mxu0 0.0
    %1911 = vmatpush2.msra.mxu0 0.0
    %1912 = vmatprep.subr.mxu0 0.0
    %1913 = vmatpush2.msra.mxu0 0.0
    %1914 = vmatprep.subr.mxu0 0.0
    %1915 = vmatpush2.msra.mxu0 0.0
    %1916 = vmatprep.subr.mxu0 0.0
    %1917 = vmatpush2.msra.mxu0 0.0
    %1918 = vmatprep.subr.mxu0 0.0
    %1919 = vmatpush2.msra.mxu0 0.0
    %1920 = vmatprep.subr.mxu0 0.0
    %1921 = vmatpush2.msra.mxu0 0.0
    %1922 = vmatprep.subr.mxu0 0.0
    %1923 = vmatpush2.msra.mxu0 0.0
    %1924 = vmatprep.subr.mxu0 0.0
    %1925 = vmatpush2.msra.mxu0 0.0
    %1926 = vmatprep.subr.mxu0 0.0
    %1927 = vmatpush2.msra.mxu0 0.0
    %1928 = vmatprep.subr.mxu0 0.0
    %1929 = vmatpush2.msra.mxu0 0.0
    %1930 = vmatprep.subr.mxu0 0.0
    %1931 = vmatpush2.msra.mxu0 0.0
    %1932 = vmatprep.mubr.f32.mxu0 0.0
    %v1933 = vand.u32 %v1295, 4294901760
    %1934 = vmatmul.mubr.f32.gmra.mxu0 %v1933
    %v1935 = vpop.f32.mrf.mxu0
    %v1936 = vadd.f32 %v1849, %v1935
    %v1937 = vpop.f32.mrf.mxu0
    %1938 = vdwg.mxu0
    %1939 = vst [vmem:[#allocation3] sm:$0x1] %v1936
    // Predicated region
    $region22: #{value_critic_forward.1} parent=1 // pred_check
      _
    $region23: #{value_critic_forward.1} parent=1 // pred_check_branch
      %1941 = sbr.rel (0) target = $region25
    $region24: #{value_critic_forward.1} parent=1 // pred_region
      %s1943 = ssub.s32 16, 16
      %1944 = vsyncadd [#allocation4], %s1943
      %s1946 = sshll.u32 [#allocation3], 4
      %s1947 = int_to_ptr.vmem [resolvable:$true] %s1946
      %1949 = dma.vmem_to_hbm [thread:$0]  %s1947, 16, %s5, [#allocation4]
    $region25: #{value_critic_forward.1} parent=1 // pred_fallthru
      _
    // Predicated region
    $region26: #{value_critic_forward.1} parent=1 // pred_check
      _
    $region27: #{value_critic_forward.1} parent=1 // pred_check_branch
      %1951 = sbr.rel (0) target = $region29
    $region28: #{value_critic_forward.1} parent=1 // pred_region
      %1952 = dma.done [#allocation4], 16
    $region29: #{value_critic_forward.1} parent=1 // pred_fallthru
      _
    %1953 = vsyncpa [#allocation4], 1

</llo_original>
